<compile_context>
chip_gen: v6e
topology: v6e:2x2x1
jax: 0.10.0
libtpu: 0.0.40
codegen_flags: <defaults>
</compile_context>

<pallas_src>
import jax
import jax.numpy as jnp
from jax.experimental import pallas as pl
from jax.experimental.pallas import tpu as pltpu


def _round_up(x, m):
    return (x + m - 1) // m * m


def _attn_net_kernel(x_ref, w1_ref, b1_ref, w2_ref, b2_ref, a_ref):
    # x_ref : (tm, L)     bf16 tile of instances
    # w1_ref: (L, D) bf16, b1_ref: (1, D) f32
    # w2_ref: (D, Cpad) bf16, b2_ref: (1, Cpad) f32
    # a_ref : (tm, Cpad) f32 attention logits (lane-dense, Cpad % 128 == 0)
    h = jnp.dot(x_ref[...], w1_ref[...], preferred_element_type=jnp.float32)
    h = jnp.tanh(h + b1_ref[...])                       # bias + tanh in f32 (EUP)
    a = jnp.dot(h.astype(w2_ref.dtype), w2_ref[...],    # cast only at the MXU input
                preferred_element_type=jnp.float32)
    a_ref[...] = (a + b2_ref[...]).astype(a_ref.dtype)


def attn_net_forward(x, w1, b1, w2, b2, *, tm=512, compute_dtype=jnp.bfloat16):
    """Pallas implementation of Attn_Net.forward. Returns (A, x).

    x : [N, L] float32 (arbitrary N; padded/masked internally)
    w1: [L, D], b1: [1, D] (or [D])
    w2: [D, C], b2: [1, C] (or [C])
    """
    N, L = x.shape
    D = w1.shape[1]
    C = w2.shape[1]

    # ---- lane-dense output: pad the class dim to a full 128-lane register ----
    C_pad = _round_up(max(C, 1), 128)

    # ---- row tile: sublane-aligned, >= 2 grid steps when the bag is big enough
    #      (keeps both v7x TensorCores busy via the "parallel" grid axis) ------
    n_al = _round_up(max(N, 1), 8)
    tm_req = max(8, _round_up(min(tm, 1024), 8))
    if n_al <= tm_req:
        tm_eff = _round_up((n_al + 1) // 2, 8) if n_al >= 16 else n_al
    else:
        tm_eff = tm_req
    N_pad = _round_up(N, tm_eff)               # ragged N -> zero-padded tail tile

    # ---- wrapper-side padding / casting ----
    x_p = x if N_pad == N else jnp.pad(x, ((0, N_pad - N), (0, 0)))
    b1_p = jnp.reshape(b1, (1, D))
    w2_p = jnp.pad(jnp.reshape(w2, (D, C)), ((0, 0), (0, C_pad - C)))
    b2_p = jnp.pad(jnp.reshape(b2, (1, C)), ((0, 0), (0, C_pad - C)))

    x_c = x_p.astype(compute_dtype)            # bf16 MXU inputs, f32 accumulation
    w1_c = w1.astype(compute_dtype)
    w2_c = w2_p.astype(compute_dtype)
    b1_c = b1_p.astype(jnp.float32)
    b2_c = b2_p.astype(jnp.float32)

    grid = (N_pad // tm_eff,)

    itemsize = jnp.dtype(compute_dtype).itemsize
    cost = pl.CostEstimate(
        flops=2 * N_pad * (L * D + D * C_pad),
        transcendentals=N_pad * D,
        bytes_accessed=(N_pad * L * itemsize        # x read
                        + L * D * itemsize          # W1
                        + D * C_pad * itemsize      # W2
                        + (D + C_pad) * 4           # biases
                        + N_pad * C_pad * 4),       # A write
    )

    a_pad = pl.pallas_call(
        _attn_net_kernel,
        out_shape=jax.ShapeDtypeStruct((N_pad, C_pad), jnp.float32),
        grid_spec=pltpu.PrefetchScalarGridSpec(
            num_scalar_prefetch=0,
            grid=grid,
            in_specs=[
                pl.BlockSpec((tm_eff, L), lambda i: (i, 0)),    # x tile (pipelined)
                pl.BlockSpec((L, D), lambda i: (0, 0)),         # W1 (resident)
                pl.BlockSpec((1, D), lambda i: (0, 0)),         # b1
                pl.BlockSpec((D, C_pad), lambda i: (0, 0)),     # W2 (padded, resident)
                pl.BlockSpec((1, C_pad), lambda i: (0, 0)),     # b2
            ],
            out_specs=pl.BlockSpec((tm_eff, C_pad), lambda i: (i, 0)),
        ),
        compiler_params=pltpu.CompilerParams(
            dimension_semantics=("parallel",),
            vmem_limit_bytes=64 << 20),
        cost_estimate=cost,
    )(x_c, w1_c, b1_c, w2_c, b2_c)

    # Strip the row padding and the class-dim padding.
    return a_pad[:N, :C], x


def init_params(key, L, D, n_classes, dtype=jnp.float32):
    """Deterministic PyTorch-style (uniform +-1/sqrt(fan_in)) init."""
    k1, k2, k3, k4 = jax.random.split(key, 4)
    lim1 = 1.0 / (L ** 0.5)
    lim2 = 1.0 / (D ** 0.5)
    w1 = jax.random.uniform(k1, (L, D), dtype, minval=-lim1, maxval=lim1)
    b1 = jax.random.uniform(k2, (1, D), dtype, minval=-lim1, maxval=lim1)
    w2 = jax.random.uniform(k3, (D, n_classes), dtype, minval=-lim2, maxval=lim2)
    b2 = jax.random.uniform(k4, (1, n_classes), dtype, minval=-lim2, maxval=lim2)
    return w1, b1, w2, b2


if __name__ == "__main__":
    # Module defaults: L=1024, D=256, n_classes=1.  N is a (small) bag of
    # instances and is deliberately NOT a multiple of 8 or the tile, so the
    # ragged-N / padded-tail path is exercised.  The auto tile picker gives a
    # 2-step parallel grid (both v7x TensorCores busy).
    N, L, D, n_classes = 300, 1024, 256, 1

    key = jax.random.PRNGKey(0)
    kx, kp = jax.random.split(key)
    x = jax.random.normal(kx, (N, L), dtype=jnp.float32)
    w1, b1, w2, b2 = init_params(kp, L, D, n_classes)

    A, x_out = attn_net_forward(x, w1, b1, w2, b2)
    jax.block_until_ready((A, x_out))

    # Reference check against plain-JAX f32 forward (bf16 MXU inputs -> loose tol).
    A_ref = jnp.tanh(x @ w1 + b1) @ w2 + b2
    assert A.shape == (N, n_classes)
    assert x_out.shape == (N, L)
    assert jnp.allclose(A, A_ref, atol=5e-2, rtol=5e-2), (
        float(jnp.max(jnp.abs(A - A_ref))))
    assert jnp.array_equal(x_out, x)

    print("KERNEL_OK")
</pallas_src>

<mosaic_0001>
module attributes {stable_mosaic.version = 11 : i64} {
  func.func @_attn_net_kernel(%arg0: i32, %arg1: memref<152x1024xbf16, #tpu.memory_space<vmem>>, %arg2: memref<1024x256xbf16, #tpu.memory_space<vmem>>, %arg3: memref<1x256xf32, #tpu.memory_space<vmem>>, %arg4: memref<256x128xbf16, #tpu.memory_space<vmem>>, %arg5: memref<1x128xf32, #tpu.memory_space<vmem>>, %arg6: memref<152x128xf32, #tpu.memory_space<vmem>>) attributes {dimension_semantics = [#tpu.dimension_semantics<parallel>], iteration_bounds = array<i64: 2>, scalar_prefetch = 0 : i64, scratch_operands = 0 : i64, tpu.core_type = #tpu.core_type<tc>, window_params = [{transform_indices = @transform_0, window_bounds = array<i64: 152, 1024>}, {pipeline_mode = #tpu.pipeline_mode<synchronous>, transform_indices = @transform_1, window_bounds = array<i64: 1024, 256>}, {pipeline_mode = #tpu.pipeline_mode<synchronous>, transform_indices = @transform_2, window_bounds = array<i64: 1, 256>}, {pipeline_mode = #tpu.pipeline_mode<synchronous>, transform_indices = @transform_3, window_bounds = array<i64: 256, 128>}, {pipeline_mode = #tpu.pipeline_mode<synchronous>, transform_indices = @transform_4, window_bounds = array<i64: 1, 128>}, {transform_indices = @transform_5, window_bounds = array<i64: 152, 128>}]} {
    %c0 = arith.constant 0 : index
    %c0_0 = arith.constant 0 : index
    %0 = vector.load %arg1[%c0, %c0_0] : memref<152x1024xbf16, #tpu.memory_space<vmem>>, vector<152x1024xbf16>
    %c0_1 = arith.constant 0 : index
    %c0_2 = arith.constant 0 : index
    %1 = vector.load %arg2[%c0_1, %c0_2] : memref<1024x256xbf16, #tpu.memory_space<vmem>>, vector<1024x256xbf16>
    %cst = arith.constant dense<0.000000e+00> : vector<152x256xf32>
    %2 = tpu.matmul %0, %1, %cst {dimension_numbers = #tpu.dot_dimension_numbers<[1], [0], [0], [1], [0, 0, 1, 1], [], []>} : vector<152x1024xbf16>, vector<1024x256xbf16>, vector<152x256xf32> -> vector<152x256xf32>
    %c0_3 = arith.constant 0 : index
    %c0_4 = arith.constant 0 : index
    %3 = vector.load %arg3[%c0_3, %c0_4] : memref<1x256xf32, #tpu.memory_space<vmem>>, vector<1x256xf32>
    %4 = vector.broadcast %3 : vector<1x256xf32> to vector<152x256xf32>
    %5 = arith.addf %2, %4 : vector<152x256xf32>
    %6 = math.tanh %5 : vector<152x256xf32>
    %7 = arith.truncf %6 : vector<152x256xf32> to vector<152x256xbf16>
    %c0_5 = arith.constant 0 : index
    %c0_6 = arith.constant 0 : index
    %8 = vector.load %arg4[%c0_5, %c0_6] : memref<256x128xbf16, #tpu.memory_space<vmem>>, vector<256x128xbf16>
    %cst_7 = arith.constant dense<0.000000e+00> : vector<152x128xf32>
    %9 = tpu.matmul %7, %8, %cst_7 {dimension_numbers = #tpu.dot_dimension_numbers<[1], [0], [0], [1], [0, 0, 1, 1], [], []>} : vector<152x256xbf16>, vector<256x128xbf16>, vector<152x128xf32> -> vector<152x128xf32>
    %c0_8 = arith.constant 0 : index
    %c0_9 = arith.constant 0 : index
    %10 = vector.load %arg5[%c0_8, %c0_9] : memref<1x128xf32, #tpu.memory_space<vmem>>, vector<1x128xf32>
    %11 = vector.broadcast %10 : vector<1x128xf32> to vector<152x128xf32>
    %12 = arith.addf %9, %11 : vector<152x128xf32>
    %c0_10 = arith.constant 0 : index
    %c0_11 = arith.constant 0 : index
    %13 = vector.load %arg6[%c0_10, %c0_11] : memref<152x128xf32, #tpu.memory_space<vmem>>, vector<152x128xf32>
    tpu.vector_store %arg6[%c0_10, %c0_11], %12 {strides = array<i32>} : memref<152x128xf32, #tpu.memory_space<vmem>>, vector<152x128xf32>,
    return
  }
  func.func @transform_0(%arg0: i32) -> (i32, i32) {
    %c0_i32 = arith.constant 0 : i32
    %c0_i32_0 = arith.constant 0 : i32
    return %arg0, %c0_i32 : i32, i32
  }
  func.func @transform_1(%arg0: i32) -> (i32, i32) {
    %c0_i32 = arith.constant 0 : i32
    %c0_i32_0 = arith.constant 0 : i32
    %c0_i32_1 = arith.constant 0 : i32
    return %c0_i32, %c0_i32_0 : i32, i32
  }
  func.func @transform_2(%arg0: i32) -> (i32, i32) {
    %c0_i32 = arith.constant 0 : i32
    %c0_i32_0 = arith.constant 0 : i32
    %c0_i32_1 = arith.constant 0 : i32
    return %c0_i32, %c0_i32_0 : i32, i32
  }
  func.func @transform_3(%arg0: i32) -> (i32, i32) {
    %c0_i32 = arith.constant 0 : i32
    %c0_i32_0 = arith.constant 0 : i32
    %c0_i32_1 = arith.constant 0 : i32
    return %c0_i32, %c0_i32_0 : i32, i32
  }
  func.func @transform_4(%arg0: i32) -> (i32, i32) {
    %c0_i32 = arith.constant 0 : i32
    %c0_i32_0 = arith.constant 0 : i32
    %c0_i32_1 = arith.constant 0 : i32
    return %c0_i32, %c0_i32_0 : i32, i32
  }
  func.func @transform_5(%arg0: i32) -> (i32, i32) {
    %c0_i32 = arith.constant 0 : i32
    %c0_i32_0 = arith.constant 0 : i32
    return %arg0, %c0_i32 : i32, i32
  }
}

</mosaic_0001>

<llo_original>
// kernel: tpu_custom_call.1
$region0: #{tpu_custom_call.1}
  #allocation0 [shape = 'u32[]', space=smem, size = 0x4, offset = 0x4, fixed_abs, tag = 'smem constant byte address 0x4 - core index']
  #allocation1 [shape = 'u32[144,128]{1,0:T(1,128)}', space=vmem, size = 0x12000, scoped, tag = 'internal scratch']
  %s0 = inlined_call_operand.hbm [shape: bf16[304,1024], index: 0, kind: input, shape index: {}]
  %s1 = inlined_call_operand.hbm [shape: bf16[1024,256], index: 1, kind: input, shape index: {}]
  %s2 = inlined_call_operand.vmem [shape: f32[1,256], index: 2, kind: input, shape index: {}]
  %s3 = inlined_call_operand.hbm [shape: bf16[256,128], index: 3, kind: input, shape index: {}]
  %s4 = inlined_call_operand.vmem [shape: f32[1,128], index: 4, kind: input, shape index: {}]
  %s5 = inlined_call_operand.hbm [shape: f32[304,128], index: 5, kind: output, shape index: {}]
  %s6 = sld [smem:[#allocation0]]
  $region65: #{tpu_custom_call.1} parent=0
    _
  %s8 = ssub.s32 1, %s6
  %s9 = scalar_select 0, %s8, %s6
  $region1: #{tpu_custom_call.1} parent=0
    #allocation2 [shape = 'u8[622592]{0}', space=vmem, size = 0x98000, scoped, tag = 'input window, operand 0']
    #allocation3 [shape = 's32[2]{0}', space=sflag, size = 0x8, scoped, tag = 'scoped memory for tpu_custom_call.1']
    #allocation4 [shape = 's32[2]{0}', space=sflag, size = 0x8, scoped, tag = 'scoped memory for tpu_custom_call.1']
    #allocation5 [shape = 'u8[524288]{0}', space=vmem, size = 0x80000, scoped, tag = 'input window, operand 1, single buffered']
    #allocation6 [shape = 's32[1]{0}', space=sflag, size = 0x4, scoped, tag = 'scoped memory for tpu_custom_call.1']
    #allocation7 [shape = 'u8[65536]{0}', space=vmem, size = 0x10000, scoped, tag = 'input window, operand 3, single buffered']
    #allocation8 [shape = 'u8[155648]{0}', space=vmem, size = 0x26000, scoped, tag = 'output window, operand 0']
    %10 = vsyncpa [#allocation3], 0
    %s11 = scalar_lea.sflag [#allocation3], 1
    %12 = vsyncpa %s11, 0
    %13 = vsyncpa [#allocation6], 0
    %14 = vsyncpa [#allocation4], 0
    %s15 = scalar_lea.sflag [#allocation4], 1
    %16 = vsyncpa %s15, 0
    loop: start=0, step=1, limit=4
    $region2: #{tpu_custom_call.1} parent=1 // loop_pre_header
      _
    $region3: #{tpu_custom_call.1} parent=1 // loop_header
      %s18 = sphi 0, %s22
      %p19 = scmp.ge.s32.totalorder %s18, 4
      %s28 = sphi 0, %s30
      %s31 = sphi 0, %s28
      %s32 = sphi 0, %s31
      %s48 = sphi 0, %s32
      %s52 = sphi 0, %s52
      %s54 = sphi 0, %s52
      %s55 = sphi 0, %s54
      %s69 = sphi 0, %s55
      %s73 = sphi 0, %s73
      %s75 = sphi 0, %s73
      %s76 = sphi 0, %s75
      %s90 = sphi 0, %s76
      %s94 = sphi 0, %s94
      %s96 = sphi 0, %s94
      %s97 = sphi 0, %s96
      %s111 = sphi 0, %s97
      %s115 = sphi 0, %s115
      %s117 = sphi 0, %s115
      %s118 = sphi 0, %s117
      %s132 = sphi 0, %s118
      %s138 = sphi 0, %s140
      %s141 = sphi 0, %s138
      %s142 = sphi 0, %s141
      %s158 = sphi 0, %s142
    $region4: #{tpu_custom_call.1} parent=1 // loop_header_branch
      %21 = sbr.rel (%p19) target = $region8
    $region5: #{tpu_custom_call.1} parent=1 // loop_body
      %s23 = ssub.s32 %s18, 1
      %s24 = ssub.s32 %s18, 2
      %s25 = sadd.s32 %s18, 1
      %s26 = ssub.s32 %s18, %s25
      %p27 = scmp.eq.s32.totalorder %s26, 0
      %s29 = sadd.s32 %s28, 1
      %s30 = scalar_select %p27, %s28, %s29
      %p33 = pneg %p27
      %p34 = scmp.eq.s32.totalorder %s18, 1
      %p35 = por %p33, %p34
      %p36 = scmp.ne.s32.totalorder %s28, %s31
      %p37 = scmp.eq.s32.totalorder %s18, 0
      %p38 = por %p36, %p37
      %p39 = scmp.ne.s32.totalorder %s28, %s31
      %p40 = scmp.eq.s32.totalorder %s23, 1
      %p41 = por %p39, %p40
      %p42 = scmp.ne.s32.totalorder %s31, %s32
      %p43 = scmp.eq.s32.totalorder %s23, 0
      %p44 = por %p42, %p43
      %p45 = scmp.ne.s32.totalorder %s31, %s32
      %p46 = scmp.eq.s32.totalorder %s24, 1
      %p47 = por %p45, %p46
      %p49 = scmp.ne.s32.totalorder %s32, %s48
      %p50 = scmp.eq.s32.totalorder %s24, 0
      %p51 = por %p49, %p50
      %s53 = sadd.s32 %s52, 1
      %p56 = scmp.eq.s32.totalorder %s18, 1
      %p57 = scmp.ne.s32.totalorder %s52, %s54
      %p58 = scmp.eq.s32.totalorder %s18, 0
      %p59 = por %p57, %p58
      %p60 = scmp.ne.s32.totalorder %s52, %s54
      %p61 = scmp.eq.s32.totalorder %s23, 1
      %p62 = por %p60, %p61
      %p63 = scmp.ne.s32.totalorder %s54, %s55
      %p64 = scmp.eq.s32.totalorder %s23, 0
      %p65 = por %p63, %p64
      %p66 = scmp.ne.s32.totalorder %s54, %s55
      %p67 = scmp.eq.s32.totalorder %s24, 1
      %p68 = por %p66, %p67
      %p70 = scmp.ne.s32.totalorder %s55, %s69
      %p71 = scmp.eq.s32.totalorder %s24, 0
      %p72 = por %p70, %p71
      %s74 = sadd.s32 %s73, 1
      %p77 = scmp.eq.s32.totalorder %s18, 1
      %p78 = scmp.ne.s32.totalorder %s73, %s75
      %p79 = scmp.eq.s32.totalorder %s18, 0
      %p80 = por %p78, %p79
      %p81 = scmp.ne.s32.totalorder %s73, %s75
      %p82 = scmp.eq.s32.totalorder %s23, 1
      %p83 = por %p81, %p82
      %p84 = scmp.ne.s32.totalorder %s75, %s76
      %p85 = scmp.eq.s32.totalorder %s23, 0
      %p86 = por %p84, %p85
      %p87 = scmp.ne.s32.totalorder %s75, %s76
      %p88 = scmp.eq.s32.totalorder %s24, 1
      %p89 = por %p87, %p88
      %p91 = scmp.ne.s32.totalorder %s76, %s90
      %p92 = scmp.eq.s32.totalorder %s24, 0
      %p93 = por %p91, %p92
      %s95 = sadd.s32 %s94, 1
      %p98 = scmp.eq.s32.totalorder %s18, 1
      %p99 = scmp.ne.s32.totalorder %s94, %s96
      %p100 = scmp.eq.s32.totalorder %s18, 0
      %p101 = por %p99, %p100
      %p102 = scmp.ne.s32.totalorder %s94, %s96
      %p103 = scmp.eq.s32.totalorder %s23, 1
      %p104 = por %p102, %p103
      %p105 = scmp.ne.s32.totalorder %s96, %s97
      %p106 = scmp.eq.s32.totalorder %s23, 0
      %p107 = por %p105, %p106
      %p108 = scmp.ne.s32.totalorder %s96, %s97
      %p109 = scmp.eq.s32.totalorder %s24, 1
      %p110 = por %p108, %p109
      %p112 = scmp.ne.s32.totalorder %s97, %s111
      %p113 = scmp.eq.s32.totalorder %s24, 0
      %p114 = por %p112, %p113
      %s116 = sadd.s32 %s115, 1
      %p119 = scmp.eq.s32.totalorder %s18, 1
      %p120 = scmp.ne.s32.totalorder %s115, %s117
      %p121 = scmp.eq.s32.totalorder %s18, 0
      %p122 = por %p120, %p121
      %p123 = scmp.ne.s32.totalorder %s115, %s117
      %p124 = scmp.eq.s32.totalorder %s23, 1
      %p125 = por %p123, %p124
      %p126 = scmp.ne.s32.totalorder %s117, %s118
      %p127 = scmp.eq.s32.totalorder %s23, 0
      %p128 = por %p126, %p127
      %p129 = scmp.ne.s32.totalorder %s117, %s118
      %p130 = scmp.eq.s32.totalorder %s24, 1
      %p131 = por %p129, %p130
      %p133 = scmp.ne.s32.totalorder %s118, %s132
      %p134 = scmp.eq.s32.totalorder %s24, 0
      %p135 = por %p133, %p134
      %s136 = ssub.s32 %s18, %s25
      %p137 = scmp.eq.s32.totalorder %s136, 0
      %s139 = sadd.s32 %s138, 1
      %s140 = scalar_select %p137, %s138, %s139
      %p143 = pneg %p137
      %p144 = scmp.eq.s32.totalorder %s18, 1
      %p145 = por %p143, %p144
      %p146 = scmp.ne.s32.totalorder %s138, %s141
      %p147 = scmp.eq.s32.totalorder %s18, 0
      %p148 = por %p146, %p147
      %p149 = scmp.ne.s32.totalorder %s138, %s141
      %p150 = scmp.eq.s32.totalorder %s23, 1
      %p151 = por %p149, %p150
      %p152 = scmp.ne.s32.totalorder %s141, %s142
      %p153 = scmp.eq.s32.totalorder %s23, 0
      %p154 = por %p152, %p153
      %p155 = scmp.ne.s32.totalorder %s141, %s142
      %p156 = scmp.eq.s32.totalorder %s24, 1
      %p157 = por %p155, %p156
      %p159 = scmp.ne.s32.totalorder %s142, %s158
      %p160 = scmp.eq.s32.totalorder %s24, 0
      %p161 = por %p159, %p160
      %p162 = scmp.le.s32.totalorder 1, %s18
      %p163 = scmp.lt.s32.totalorder %s18, 3
      %p164 = pnand %p162, %p163
      %p165 = pneg %p164
      // Predicated region
      $region9: #{tpu_custom_call.1} parent=5 // pred_check
        _
      $region10: #{tpu_custom_call.1} parent=5 // pred_check_branch
        %167 = sbr.rel (%p164) target = $region12
      $region11: #{tpu_custom_call.1} parent=5 // pred_region
        %s168 = ssub.s32 %s18, 1
        // Predicated region
        $region13: #{tpu_custom_call.1} parent=11 // pred_check
          %p169 = pneg %p65
        $region14: #{tpu_custom_call.1} parent=11 // pred_check_branch
          %171 = sbr.rel (%p169) target = $region16
        $region15: #{tpu_custom_call.1} parent=11 // pred_region
          %s173 = ssub.s32 16384, 16384
          %174 = vsyncadd [#allocation6], %s173
          %s175 = sshll.u32 [#allocation5], 4
          %s176 = int_to_ptr.vmem [resolvable:$true] %s175
          %181 = dma.hbm_to_vmem [thread:$0]  %s1, 16384, %s176, [#allocation6], 128, 128, 8
        $region16: #{tpu_custom_call.1} parent=11 // pred_fallthru
          _
        // Predicated region
        $region17: #{tpu_custom_call.1} parent=11 // pred_check
          %p182 = pneg %p86
        $region18: #{tpu_custom_call.1} parent=11 // pred_check_branch
          %184 = sbr.rel (%p182) target = $region20
        $region19: #{tpu_custom_call.1} parent=11 // pred_region
          _
        $region20: #{tpu_custom_call.1} parent=11 // pred_fallthru
          _
        // Predicated region
        $region21: #{tpu_custom_call.1} parent=11 // pred_check
          %p185 = pneg %p107
        $region22: #{tpu_custom_call.1} parent=11 // pred_check_branch
          %187 = sbr.rel (%p185) target = $region24
        $region23: #{tpu_custom_call.1} parent=11 // pred_region
          %s189 = ssub.s32 2048, 2048
          %190 = vsyncadd [#allocation6], %s189
          %s191 = sshll.u32 [#allocation7], 4
          %s192 = int_to_ptr.vmem [resolvable:$true] %s191
          %197 = dma.hbm_to_vmem [thread:$0]  %s3, 2048, %s192, [#allocation6], 64, 64, 4
        $region24: #{tpu_custom_call.1} parent=11 // pred_fallthru
          _
        // Predicated region
        $region25: #{tpu_custom_call.1} parent=11 // pred_check
          %p198 = pneg %p128
        $region26: #{tpu_custom_call.1} parent=11 // pred_check_branch
          %200 = sbr.rel (%p198) target = $region28
        $region27: #{tpu_custom_call.1} parent=11 // pred_region
          _
        $region28: #{tpu_custom_call.1} parent=11 // pred_fallthru
          _
      $region12: #{tpu_custom_call.1} parent=5 // pred_fallthru
        _
      %p201 = scmp.lt.s32.totalorder %s18, 2
      // Predicated region
      $region29: #{tpu_custom_call.1} parent=5 // pred_check
        %p202 = pneg %p201
      $region30: #{tpu_custom_call.1} parent=5 // pred_check_branch
        %204 = sbr.rel (%p202) target = $region32
      $region31: #{tpu_custom_call.1} parent=5 // pred_region
        // Predicated region
        $region33: #{tpu_custom_call.1} parent=31 // pred_check
          %p205 = pneg %p38
        $region34: #{tpu_custom_call.1} parent=31 // pred_check_branch
          %207 = sbr.rel (%p205) target = $region36
        $region35: #{tpu_custom_call.1} parent=31 // pred_region
          %s208 = sand.u32 %s28, 1
          %s209 = scalar_lea.sflag [#allocation3], %s208
          %s210 = sand.u32 %s28, 1
          %s211 = smul.addr %s210, 608
          %s212 = scalar_lea.vmem [#allocation2], %s211
          %s213 = smul.u32 19, %s18
          %s215 = ssub.s32 9728, 9728
          %216 = vsyncadd %s209, %s215
          %s217 = smul.addr %s213, 8
          %s218 = smul.addr %s217, 64
          %s219 = scalar_lea.hbm %s0, %s218
          %s220 = sshll.u32 %s212, 4
          %s221 = int_to_ptr.vmem [resolvable:$true] %s220
          %226 = dma.hbm_to_vmem [thread:$0]  %s219, 9728, %s221, %s209, 512, 512, 32
        $region36: #{tpu_custom_call.1} parent=31 // pred_fallthru
          _
      $region32: #{tpu_custom_call.1} parent=5 // pred_fallthru
        _
      %p227 = scmp.le.s32.totalorder 1, %s18
      %p228 = scmp.lt.s32.totalorder %s18, 3
      %p229 = pnand %p227, %p228
      %p230 = pneg %p229
      // Predicated region
      $region37: #{tpu_custom_call.1} parent=5 // pred_check
        _
      $region38: #{tpu_custom_call.1} parent=5 // pred_check_branch
        %232 = sbr.rel (%p229) target = $region40
      $region39: #{tpu_custom_call.1} parent=5 // pred_region
        %s233 = ssub.s32 %s18, 1
        %s234 = sand.u32 %s31, 1
        %s235 = scalar_lea.sflag [#allocation3], %s234
        %s236 = sand.u32 %s31, 1
        %s237 = smul.addr %s236, 608
        %s238 = scalar_lea.vmem [#allocation2], %s237
        // Predicated region
        $region41: #{tpu_custom_call.1} parent=39 // pred_check
          %p239 = pneg %p44
        $region42: #{tpu_custom_call.1} parent=39 // pred_check_branch
          %241 = sbr.rel (%p239) target = $region44
        $region43: #{tpu_custom_call.1} parent=39 // pred_region
          %242 = dma.done %s235, 9728
        $region44: #{tpu_custom_call.1} parent=39 // pred_fallthru
          _
        // Predicated region
        $region45: #{tpu_custom_call.1} parent=39 // pred_check
          %p243 = pneg %p65
        $region46: #{tpu_custom_call.1} parent=39 // pred_check_branch
          %245 = sbr.rel (%p243) target = $region48
        $region47: #{tpu_custom_call.1} parent=39 // pred_region
          %246 = dma.done [#allocation6], 16384
        $region48: #{tpu_custom_call.1} parent=39 // pred_fallthru
          _
        // Predicated region
        $region49: #{tpu_custom_call.1} parent=39 // pred_check
          %p247 = pneg %p107
        $region50: #{tpu_custom_call.1} parent=39 // pred_check_branch
          %249 = sbr.rel (%p247) target = $region52
        $region51: #{tpu_custom_call.1} parent=39 // pred_region
          %250 = dma.done [#allocation6], 2048
        $region52: #{tpu_custom_call.1} parent=39 // pred_fallthru
          _
        %s251 = sand.u32 %s31, 1
        %s252 = scalar_lea.sflag [#allocation3], %s251
        %s253 = sand.u32 %s31, 1
        %s254 = smul.addr %s253, 608
        %s255 = scalar_lea.vmem [#allocation2], %s254
        %p256 = pneg %p44
        %p257 = pneg %p41
        %p258 = pneg %p65
        %p259 = pneg %p62
        %p260 = pneg %p86
        %p261 = pneg %p83
        %p262 = pneg %p107
        %p263 = pneg %p104
        %p264 = pneg %p128
        %p265 = pneg %p125
        %p266 = pneg %p154
        %p267 = pneg %p151
        %s268 = sand.u32 %s141, 1
        %s269 = scalar_lea.sflag [#allocation4], %s268
        %s270 = sand.u32 %s141, 1
        %s271 = smul.addr %s270, 152
        %s272 = scalar_lea.vmem [#allocation8], %s271
        %s273 = smul.u32 19, %s23
        %s274 = smul.u32 19, %s23
        %v276 = vld [vmem:[%s238] sm:$0xff]
        %v277 = vld [vmem:[%s238 + $0x8] sm:$0xff]
        %v278 = vld [vmem:[%s238 + $0x10] sm:$0xff]
        %v279 = vld [vmem:[%s238 + $0x18] sm:$0xff]
        %v280 = vld [vmem:[%s238 + $0x20] sm:$0xff]
        %v281 = vld [vmem:[%s238 + $0x28] sm:$0xff]
        %v282 = vld [vmem:[%s238 + $0x30] sm:$0xff]
        %v283 = vld [vmem:[%s238 + $0x38] sm:$0xff]
        %v284 = vld [vmem:[%s238 + $0x40] sm:$0xff]
        %v285 = vld [vmem:[%s238 + $0x48] sm:$0xff]
        %v286 = vld [vmem:[%s238 + $0x50] sm:$0xff]
        %v287 = vld [vmem:[%s238 + $0x58] sm:$0xff]
        %v288 = vld [vmem:[%s238 + $0x60] sm:$0xff]
        %v289 = vld [vmem:[%s238 + $0x68] sm:$0xff]
        %v290 = vld [vmem:[%s238 + $0x70] sm:$0xff]
        %v291 = vld [vmem:[%s238 + $0x78] sm:$0xff]
        %v292 = vld [vmem:[%s238 + $0x80] sm:$0xff]
        %v293 = vld [vmem:[%s238 + $0x88] sm:$0xff]
        %v294 = vld [vmem:[%s238 + $0x90] sm:$0xff]
        %v295 = vld [vmem:[%s238 + $0x98] sm:$0xff]
        %v296 = vld [vmem:[%s238 + $0xa0] sm:$0xff]
        %v297 = vld [vmem:[%s238 + $0xa8] sm:$0xff]
        %v298 = vld [vmem:[%s238 + $0xb0] sm:$0xff]
        %v299 = vld [vmem:[%s238 + $0xb8] sm:$0xff]
        %v300 = vld [vmem:[%s238 + $0xc0] sm:$0xff]
        %v301 = vld [vmem:[%s238 + $0xc8] sm:$0xff]
        %v302 = vld [vmem:[%s238 + $0xd0] sm:$0xff]
        %v303 = vld [vmem:[%s238 + $0xd8] sm:$0xff]
        %v304 = vld [vmem:[%s238 + $0xe0] sm:$0xff]
        %v305 = vld [vmem:[%s238 + $0xe8] sm:$0xff]
        %v306 = vld [vmem:[%s238 + $0xf0] sm:$0xff]
        %v307 = vld [vmem:[%s238 + $0xf8] sm:$0xff]
        %v308 = vld [vmem:[%s238 + $0x100] sm:$0xff]
        %v309 = vld [vmem:[%s238 + $0x108] sm:$0xff]
        %v310 = vld [vmem:[%s238 + $0x110] sm:$0xff]
        %v311 = vld [vmem:[%s238 + $0x118] sm:$0xff]
        %v312 = vld [vmem:[%s238 + $0x120] sm:$0xff]
        %v313 = vld [vmem:[%s238 + $0x128] sm:$0xff]
        %v314 = vld [vmem:[%s238 + $0x130] sm:$0xff]
        %v315 = vld [vmem:[%s238 + $0x138] sm:$0xff]
        %v316 = vld [vmem:[%s238 + $0x140] sm:$0xff]
        %v317 = vld [vmem:[%s238 + $0x148] sm:$0xff]
        %v318 = vld [vmem:[%s238 + $0x150] sm:$0xff]
        %v319 = vld [vmem:[%s238 + $0x158] sm:$0xff]
        %v320 = vld [vmem:[%s238 + $0x160] sm:$0xff]
        %v321 = vld [vmem:[%s238 + $0x168] sm:$0xff]
        %v322 = vld [vmem:[%s238 + $0x170] sm:$0xff]
        %v323 = vld [vmem:[%s238 + $0x178] sm:$0xff]
        %v324 = vld [vmem:[%s238 + $0x180] sm:$0xff]
        %v325 = vld [vmem:[%s238 + $0x188] sm:$0xff]
        %v326 = vld [vmem:[%s238 + $0x190] sm:$0xff]
        %v327 = vld [vmem:[%s238 + $0x198] sm:$0xff]
        %v328 = vld [vmem:[%s238 + $0x1a0] sm:$0xff]
        %v329 = vld [vmem:[%s238 + $0x1a8] sm:$0xff]
        %v330 = vld [vmem:[%s238 + $0x1b0] sm:$0xff]
        %v331 = vld [vmem:[%s238 + $0x1b8] sm:$0xff]
        %v332 = vld [vmem:[%s238 + $0x1c0] sm:$0xff]
        %v333 = vld [vmem:[%s238 + $0x1c8] sm:$0xff]
        %v334 = vld [vmem:[%s238 + $0x1d0] sm:$0xff]
        %v335 = vld [vmem:[%s238 + $0x1d8] sm:$0xff]
        %v336 = vld [vmem:[%s238 + $0x1e0] sm:$0xff]
        %v337 = vld [vmem:[%s238 + $0x1e8] sm:$0xff]
        %v338 = vld [vmem:[%s238 + $0x1f0] sm:$0xff]
        %v339 = vld [vmem:[%s238 + $0x1f8] sm:$0xff]
        %v340 = vld [vmem:[%s238 + $0x200] sm:$0xff]
        %v341 = vld [vmem:[%s238 + $0x208] sm:$0xff]
        %v342 = vld [vmem:[%s238 + $0x210] sm:$0xff]
        %v343 = vld [vmem:[%s238 + $0x218] sm:$0xff]
        %v344 = vld [vmem:[%s238 + $0x220] sm:$0xff]
        %v345 = vld [vmem:[%s238 + $0x228] sm:$0xff]
        %v346 = vld [vmem:[%s238 + $0x230] sm:$0xff]
        %v347 = vld [vmem:[%s238 + $0x238] sm:$0xff]
        %v348 = vld [vmem:[%s238 + $0x240] sm:$0xff]
        %v349 = vld [vmem:[%s238 + $0x248] sm:$0xff]
        %v350 = vld [vmem:[%s238 + $0x250] sm:$0xff]
        %v351 = vld [vmem:[%s238 + $0x258] sm:$0xff]
        %v352 = vld [vmem:[#allocation5] sm:$0xff]
        %v353 = vld [vmem:[#allocation5 + $0x8] sm:$0xff]
        %v354 = vld [vmem:[#allocation5 + $0x10] sm:$0xff]
        %v355 = vld [vmem:[#allocation5 + $0x18] sm:$0xff]
        %v356 = vld [vmem:[#allocation5 + $0x20] sm:$0xff]
        %v357 = vld [vmem:[#allocation5 + $0x28] sm:$0xff]
        %v358 = vld [vmem:[#allocation5 + $0x30] sm:$0xff]
        %v359 = vld [vmem:[#allocation5 + $0x38] sm:$0xff]
        %v360 = vld [vmem:[#allocation5 + $0x40] sm:$0xff]
        %v361 = vld [vmem:[#allocation5 + $0x48] sm:$0xff]
        %v362 = vld [vmem:[#allocation5 + $0x50] sm:$0xff]
        %v363 = vld [vmem:[#allocation5 + $0x58] sm:$0xff]
        %v364 = vld [vmem:[#allocation5 + $0x60] sm:$0xff]
        %v365 = vld [vmem:[#allocation5 + $0x68] sm:$0xff]
        %v366 = vld [vmem:[#allocation5 + $0x70] sm:$0xff]
        %v367 = vld [vmem:[#allocation5 + $0x78] sm:$0xff]
        %v368 = vld [vmem:[#allocation5 + $0x80] sm:$0xff]
        %v369 = vld [vmem:[#allocation5 + $0x88] sm:$0xff]
        %v370 = vld [vmem:[#allocation5 + $0x90] sm:$0xff]
        %v371 = vld [vmem:[#allocation5 + $0x98] sm:$0xff]
        %v372 = vld [vmem:[#allocation5 + $0xa0] sm:$0xff]
        %v373 = vld [vmem:[#allocation5 + $0xa8] sm:$0xff]
        %v374 = vld [vmem:[#allocation5 + $0xb0] sm:$0xff]
        %v375 = vld [vmem:[#allocation5 + $0xb8] sm:$0xff]
        %v376 = vld [vmem:[#allocation5 + $0xc0] sm:$0xff]
        %v377 = vld [vmem:[#allocation5 + $0xc8] sm:$0xff]
        %v378 = vld [vmem:[#allocation5 + $0xd0] sm:$0xff]
        %v379 = vld [vmem:[#allocation5 + $0xd8] sm:$0xff]
        %v380 = vld [vmem:[#allocation5 + $0xe0] sm:$0xff]
        %v381 = vld [vmem:[#allocation5 + $0xe8] sm:$0xff]
        %v382 = vld [vmem:[#allocation5 + $0xf0] sm:$0xff]
        %v383 = vld [vmem:[#allocation5 + $0xf8] sm:$0xff]
        %v384 = vld [vmem:[#allocation5 + $0x100] sm:$0xff]
        %v385 = vld [vmem:[#allocation5 + $0x108] sm:$0xff]
        %v386 = vld [vmem:[#allocation5 + $0x110] sm:$0xff]
        %v387 = vld [vmem:[#allocation5 + $0x118] sm:$0xff]
        %v388 = vld [vmem:[#allocation5 + $0x120] sm:$0xff]
        %v389 = vld [vmem:[#allocation5 + $0x128] sm:$0xff]
        %v390 = vld [vmem:[#allocation5 + $0x130] sm:$0xff]
        %v391 = vld [vmem:[#allocation5 + $0x138] sm:$0xff]
        %v392 = vld [vmem:[#allocation5 + $0x140] sm:$0xff]
        %v393 = vld [vmem:[#allocation5 + $0x148] sm:$0xff]
        %v394 = vld [vmem:[#allocation5 + $0x150] sm:$0xff]
        %v395 = vld [vmem:[#allocation5 + $0x158] sm:$0xff]
        %v396 = vld [vmem:[#allocation5 + $0x160] sm:$0xff]
        %v397 = vld [vmem:[#allocation5 + $0x168] sm:$0xff]
        %v398 = vld [vmem:[#allocation5 + $0x170] sm:$0xff]
        %v399 = vld [vmem:[#allocation5 + $0x178] sm:$0xff]
        %v400 = vld [vmem:[#allocation5 + $0x180] sm:$0xff]
        %v401 = vld [vmem:[#allocation5 + $0x188] sm:$0xff]
        %v402 = vld [vmem:[#allocation5 + $0x190] sm:$0xff]
        %v403 = vld [vmem:[#allocation5 + $0x198] sm:$0xff]
        %v404 = vld [vmem:[#allocation5 + $0x1a0] sm:$0xff]
        %v405 = vld [vmem:[#allocation5 + $0x1a8] sm:$0xff]
        %v406 = vld [vmem:[#allocation5 + $0x1b0] sm:$0xff]
        %v407 = vld [vmem:[#allocation5 + $0x1b8] sm:$0xff]
        %v408 = vld [vmem:[#allocation5 + $0x1c0] sm:$0xff]
        %v409 = vld [vmem:[#allocation5 + $0x1c8] sm:$0xff]
        %v410 = vld [vmem:[#allocation5 + $0x1d0] sm:$0xff]
        %v411 = vld [vmem:[#allocation5 + $0x1d8] sm:$0xff]
        %v412 = vld [vmem:[#allocation5 + $0x1e0] sm:$0xff]
        %v413 = vld [vmem:[#allocation5 + $0x1e8] sm:$0xff]
        %v414 = vld [vmem:[#allocation5 + $0x1f0] sm:$0xff]
        %v415 = vld [vmem:[#allocation5 + $0x1f8] sm:$0xff]
        %v416 = vld [vmem:[#allocation5 + $0x200] sm:$0xff]
        %v417 = vld [vmem:[#allocation5 + $0x208] sm:$0xff]
        %v418 = vld [vmem:[#allocation5 + $0x210] sm:$0xff]
        %v419 = vld [vmem:[#allocation5 + $0x218] sm:$0xff]
        %v420 = vld [vmem:[#allocation5 + $0x220] sm:$0xff]
        %v421 = vld [vmem:[#allocation5 + $0x228] sm:$0xff]
        %v422 = vld [vmem:[#allocation5 + $0x230] sm:$0xff]
        %v423 = vld [vmem:[#allocation5 + $0x238] sm:$0xff]
        %v424 = vld [vmem:[#allocation5 + $0x240] sm:$0xff]
        %v425 = vld [vmem:[#allocation5 + $0x248] sm:$0xff]
        %v426 = vld [vmem:[#allocation5 + $0x250] sm:$0xff]
        %v427 = vld [vmem:[#allocation5 + $0x258] sm:$0xff]
        %v428 = vld [vmem:[#allocation5 + $0x260] sm:$0xff]
        %v429 = vld [vmem:[#allocation5 + $0x268] sm:$0xff]
        %v430 = vld [vmem:[#allocation5 + $0x270] sm:$0xff]
        %v431 = vld [vmem:[#allocation5 + $0x278] sm:$0xff]
        %v432 = vld [vmem:[#allocation5 + $0x280] sm:$0xff]
        %v433 = vld [vmem:[#allocation5 + $0x288] sm:$0xff]
        %v434 = vld [vmem:[#allocation5 + $0x290] sm:$0xff]
        %v435 = vld [vmem:[#allocation5 + $0x298] sm:$0xff]
        %v436 = vld [vmem:[#allocation5 + $0x2a0] sm:$0xff]
        %v437 = vld [vmem:[#allocation5 + $0x2a8] sm:$0xff]
        %v438 = vld [vmem:[#allocation5 + $0x2b0] sm:$0xff]
        %v439 = vld [vmem:[#allocation5 + $0x2b8] sm:$0xff]
        %v440 = vld [vmem:[#allocation5 + $0x2c0] sm:$0xff]
        %v441 = vld [vmem:[#allocation5 + $0x2c8] sm:$0xff]
        %v442 = vld [vmem:[#allocation5 + $0x2d0] sm:$0xff]
        %v443 = vld [vmem:[#allocation5 + $0x2d8] sm:$0xff]
        %v444 = vld [vmem:[#allocation5 + $0x2e0] sm:$0xff]
        %v445 = vld [vmem:[#allocation5 + $0x2e8] sm:$0xff]
        %v446 = vld [vmem:[#allocation5 + $0x2f0] sm:$0xff]
        %v447 = vld [vmem:[#allocation5 + $0x2f8] sm:$0xff]
        %v448 = vld [vmem:[#allocation5 + $0x300] sm:$0xff]
        %v449 = vld [vmem:[#allocation5 + $0x308] sm:$0xff]
        %v450 = vld [vmem:[#allocation5 + $0x310] sm:$0xff]
        %v451 = vld [vmem:[#allocation5 + $0x318] sm:$0xff]
        %v452 = vld [vmem:[#allocation5 + $0x320] sm:$0xff]
        %v453 = vld [vmem:[#allocation5 + $0x328] sm:$0xff]
        %v454 = vld [vmem:[#allocation5 + $0x330] sm:$0xff]
        %v455 = vld [vmem:[#allocation5 + $0x338] sm:$0xff]
        %v456 = vld [vmem:[#allocation5 + $0x340] sm:$0xff]
        %v457 = vld [vmem:[#allocation5 + $0x348] sm:$0xff]
        %v458 = vld [vmem:[#allocation5 + $0x350] sm:$0xff]
        %v459 = vld [vmem:[#allocation5 + $0x358] sm:$0xff]
        %v460 = vld [vmem:[#allocation5 + $0x360] sm:$0xff]
        %v461 = vld [vmem:[#allocation5 + $0x368] sm:$0xff]
        %v462 = vld [vmem:[#allocation5 + $0x370] sm:$0xff]
        %v463 = vld [vmem:[#allocation5 + $0x378] sm:$0xff]
        %v464 = vld [vmem:[#allocation5 + $0x380] sm:$0xff]
        %v465 = vld [vmem:[#allocation5 + $0x388] sm:$0xff]
        %v466 = vld [vmem:[#allocation5 + $0x390] sm:$0xff]
        %v467 = vld [vmem:[#allocation5 + $0x398] sm:$0xff]
        %v468 = vld [vmem:[#allocation5 + $0x3a0] sm:$0xff]
        %v469 = vld [vmem:[#allocation5 + $0x3a8] sm:$0xff]
        %v470 = vld [vmem:[#allocation5 + $0x3b0] sm:$0xff]
        %v471 = vld [vmem:[#allocation5 + $0x3b8] sm:$0xff]
        %v472 = vld [vmem:[#allocation5 + $0x3c0] sm:$0xff]
        %v473 = vld [vmem:[#allocation5 + $0x3c8] sm:$0xff]
        %v474 = vld [vmem:[#allocation5 + $0x3d0] sm:$0xff]
        %v475 = vld [vmem:[#allocation5 + $0x3d8] sm:$0xff]
        %v476 = vld [vmem:[#allocation5 + $0x3e0] sm:$0xff]
        %v477 = vld [vmem:[#allocation5 + $0x3e8] sm:$0xff]
        %v478 = vld [vmem:[#allocation5 + $0x3f0] sm:$0xff]
        %v479 = vld [vmem:[#allocation5 + $0x3f8] sm:$0xff]
        %v480 = vld [vmem:[%s2] sm:$0x3]
        %v482 = vlaneseq
        %v483 = vshrl.u32 %v482, 7
        %v484 = vsub.s32 0, %v483
        %v485 = vrot.slane %v480, %v484
        %v486 = vlaneseq
        %v487 = vshrl.u32 %v486, 7
        %v488 = vsub.s32 1, %v487
        %v489 = vrot.slane %v480, %v488
        %v568 = vunpack.c.l.b16 %v276
        %v569 = vunpack.c.h.b16 %v276
        %v570 = vunpack.c.l.b16 %v277
        %v571 = vunpack.c.h.b16 %v277
        %v572 = vunpack.c.l.b16 %v278
        %v573 = vunpack.c.h.b16 %v278
        %v574 = vunpack.c.l.b16 %v279
        %v575 = vunpack.c.h.b16 %v279
        %v576 = vunpack.c.l.b16 %v280
        %v577 = vunpack.c.h.b16 %v280
        %v578 = vunpack.c.l.b16 %v281
        %v579 = vunpack.c.h.b16 %v281
        %v580 = vunpack.c.l.b16 %v282
        %v581 = vunpack.c.h.b16 %v282
        %v582 = vunpack.c.l.b16 %v283
        %v583 = vunpack.c.h.b16 %v283
        %v584 = vunpack.c.l.b16 %v284
        %v585 = vunpack.c.h.b16 %v284
        %v586 = vunpack.c.l.b16 %v285
        %v587 = vunpack.c.h.b16 %v285
        %v588 = vunpack.c.l.b16 %v286
        %v589 = vunpack.c.h.b16 %v286
        %v590 = vunpack.c.l.b16 %v287
        %v591 = vunpack.c.h.b16 %v287
        %v592 = vunpack.c.l.b16 %v288
        %v593 = vunpack.c.h.b16 %v288
        %v594 = vunpack.c.l.b16 %v289
        %v595 = vunpack.c.h.b16 %v289
        %v596 = vunpack.c.l.b16 %v290
        %v597 = vunpack.c.h.b16 %v290
        %v598 = vunpack.c.l.b16 %v291
        %v599 = vunpack.c.h.b16 %v291
        %v600 = vunpack.c.l.b16 %v292
        %v601 = vunpack.c.h.b16 %v292
        %v602 = vunpack.c.l.b16 %v293
        %v603 = vunpack.c.h.b16 %v293
        %v604 = vunpack.c.l.b16 %v294
        %v605 = vunpack.c.h.b16 %v294
        %v606 = vunpack.c.l.b16 %v295
        %v607 = vunpack.c.h.b16 %v295
        %v608 = vunpack.c.l.b16 %v296
        %v609 = vunpack.c.h.b16 %v296
        %v610 = vunpack.c.l.b16 %v297
        %v611 = vunpack.c.h.b16 %v297
        %v612 = vunpack.c.l.b16 %v298
        %v613 = vunpack.c.h.b16 %v298
        %v614 = vunpack.c.l.b16 %v299
        %v615 = vunpack.c.h.b16 %v299
        %v616 = vunpack.c.l.b16 %v300
        %v617 = vunpack.c.h.b16 %v300
        %v618 = vunpack.c.l.b16 %v301
        %v619 = vunpack.c.h.b16 %v301
        %v620 = vunpack.c.l.b16 %v302
        %v621 = vunpack.c.h.b16 %v302
        %v622 = vunpack.c.l.b16 %v303
        %v623 = vunpack.c.h.b16 %v303
        %v624 = vunpack.c.l.b16 %v304
        %v625 = vunpack.c.h.b16 %v304
        %v626 = vunpack.c.l.b16 %v305
        %v627 = vunpack.c.h.b16 %v305
        %v628 = vunpack.c.l.b16 %v306
        %v629 = vunpack.c.h.b16 %v306
        %v630 = vunpack.c.l.b16 %v307
        %v631 = vunpack.c.h.b16 %v307
        %v632 = vunpack.c.l.b16 %v308
        %v633 = vunpack.c.h.b16 %v308
        %v634 = vunpack.c.l.b16 %v309
        %v635 = vunpack.c.h.b16 %v309
        %v636 = vunpack.c.l.b16 %v310
        %v637 = vunpack.c.h.b16 %v310
        %v638 = vunpack.c.l.b16 %v311
        %v639 = vunpack.c.h.b16 %v311
        %v640 = vunpack.c.l.b16 %v312
        %v641 = vunpack.c.h.b16 %v312
        %v642 = vunpack.c.l.b16 %v313
        %v643 = vunpack.c.h.b16 %v313
        %v644 = vunpack.c.l.b16 %v314
        %v645 = vunpack.c.h.b16 %v314
        %v646 = vunpack.c.l.b16 %v315
        %v647 = vunpack.c.h.b16 %v315
        %v648 = vunpack.c.l.b16 %v316
        %v649 = vunpack.c.h.b16 %v316
        %v650 = vunpack.c.l.b16 %v317
        %v651 = vunpack.c.h.b16 %v317
        %v652 = vunpack.c.l.b16 %v318
        %v653 = vunpack.c.h.b16 %v318
        %v654 = vunpack.c.l.b16 %v319
        %v655 = vunpack.c.h.b16 %v319
        %v656 = vunpack.c.l.b16 %v320
        %v657 = vunpack.c.h.b16 %v320
        %v658 = vunpack.c.l.b16 %v321
        %v659 = vunpack.c.h.b16 %v321
        %v660 = vunpack.c.l.b16 %v322
        %v661 = vunpack.c.h.b16 %v322
        %v662 = vunpack.c.l.b16 %v323
        %v663 = vunpack.c.h.b16 %v323
        %v664 = vunpack.c.l.b16 %v324
        %v665 = vunpack.c.h.b16 %v324
        %v666 = vunpack.c.l.b16 %v325
        %v667 = vunpack.c.h.b16 %v325
        %v668 = vunpack.c.l.b16 %v326
        %v669 = vunpack.c.h.b16 %v326
        %v670 = vunpack.c.l.b16 %v327
        %v671 = vunpack.c.h.b16 %v327
        %v672 = vunpack.c.l.b16 %v328
        %v673 = vunpack.c.h.b16 %v328
        %v674 = vunpack.c.l.b16 %v329
        %v675 = vunpack.c.h.b16 %v329
        %v676 = vunpack.c.l.b16 %v330
        %v677 = vunpack.c.h.b16 %v330
        %v678 = vunpack.c.l.b16 %v331
        %v679 = vunpack.c.h.b16 %v331
        %v680 = vunpack.c.l.b16 %v332
        %v681 = vunpack.c.h.b16 %v332
        %v682 = vunpack.c.l.b16 %v333
        %v683 = vunpack.c.h.b16 %v333
        %v684 = vunpack.c.l.b16 %v334
        %v685 = vunpack.c.h.b16 %v334
        %v686 = vunpack.c.l.b16 %v335
        %v687 = vunpack.c.h.b16 %v335
        %v688 = vunpack.c.l.b16 %v336
        %v689 = vunpack.c.h.b16 %v336
        %v690 = vunpack.c.l.b16 %v337
        %v691 = vunpack.c.h.b16 %v337
        %v692 = vunpack.c.l.b16 %v338
        %v693 = vunpack.c.h.b16 %v338
        %v694 = vunpack.c.l.b16 %v339
        %v695 = vunpack.c.h.b16 %v339
        %v696 = vunpack.c.l.b16 %v340
        %v697 = vunpack.c.h.b16 %v340
        %v698 = vunpack.c.l.b16 %v341
        %v699 = vunpack.c.h.b16 %v341
        %v700 = vunpack.c.l.b16 %v342
        %v701 = vunpack.c.h.b16 %v342
        %v702 = vunpack.c.l.b16 %v343
        %v703 = vunpack.c.h.b16 %v343
        %v704 = vunpack.c.l.b16 %v344
        %v705 = vunpack.c.h.b16 %v344
        %v706 = vunpack.c.l.b16 %v345
        %v707 = vunpack.c.h.b16 %v345
        %v708 = vunpack.c.l.b16 %v346
        %v709 = vunpack.c.h.b16 %v346
        %v710 = vunpack.c.l.b16 %v347
        %v711 = vunpack.c.h.b16 %v347
        %v712 = vunpack.c.l.b16 %v348
        %v713 = vunpack.c.h.b16 %v348
        %v714 = vunpack.c.l.b16 %v349
        %v715 = vunpack.c.h.b16 %v349
        %v716 = vunpack.c.l.b16 %v350
        %v717 = vunpack.c.h.b16 %v350
        %v718 = vunpack.c.l.b16 %v351
        %v719 = vunpack.c.h.b16 %v351
        %v720 = vpack.c.b16 %v576, %v568
        %v721 = vpack.c.b16 %v577, %v569
        %v722 = vpack.c.b16 %v578, %v570
        %v723 = vpack.c.b16 %v579, %v571
        %v724 = vpack.c.b16 %v580, %v572
        %v725 = vpack.c.b16 %v581, %v573
        %v726 = vpack.c.b16 %v582, %v574
        %v727 = vpack.c.b16 %v583, %v575
        %v728 = vpack.c.b16 %v592, %v584
        %v729 = vpack.c.b16 %v593, %v585
        %v730 = vpack.c.b16 %v594, %v586
        %v731 = vpack.c.b16 %v595, %v587
        %v732 = vpack.c.b16 %v596, %v588
        %v733 = vpack.c.b16 %v597, %v589
        %v734 = vpack.c.b16 %v598, %v590
        %v735 = vpack.c.b16 %v599, %v591
        %v736 = vpack.c.b16 %v608, %v600
        %v737 = vpack.c.b16 %v609, %v601
        %v738 = vpack.c.b16 %v610, %v602
        %v739 = vpack.c.b16 %v611, %v603
        %v740 = vpack.c.b16 %v612, %v604
        %v741 = vpack.c.b16 %v613, %v605
        %v742 = vpack.c.b16 %v614, %v606
        %v743 = vpack.c.b16 %v615, %v607
        %v744 = vpack.c.b16 %v624, %v616
        %v745 = vpack.c.b16 %v625, %v617
        %v746 = vpack.c.b16 %v626, %v618
        %v747 = vpack.c.b16 %v627, %v619
        %v748 = vpack.c.b16 %v628, %v620
        %v749 = vpack.c.b16 %v629, %v621
        %v750 = vpack.c.b16 %v630, %v622
        %v751 = vpack.c.b16 %v631, %v623
        %v752 = vpack.c.b16 %v640, %v632
        %v753 = vpack.c.b16 %v641, %v633
        %v754 = vpack.c.b16 %v642, %v634
        %v755 = vpack.c.b16 %v643, %v635
        %v756 = vpack.c.b16 %v644, %v636
        %v757 = vpack.c.b16 %v645, %v637
        %v758 = vpack.c.b16 %v646, %v638
        %v759 = vpack.c.b16 %v647, %v639
        %v760 = vpack.c.b16 %v656, %v648
        %v761 = vpack.c.b16 %v657, %v649
        %v762 = vpack.c.b16 %v658, %v650
        %v763 = vpack.c.b16 %v659, %v651
        %v764 = vpack.c.b16 %v660, %v652
        %v765 = vpack.c.b16 %v661, %v653
        %v766 = vpack.c.b16 %v662, %v654
        %v767 = vpack.c.b16 %v663, %v655
        %v768 = vpack.c.b16 %v672, %v664
        %v769 = vpack.c.b16 %v673, %v665
        %v770 = vpack.c.b16 %v674, %v666
        %v771 = vpack.c.b16 %v675, %v667
        %v772 = vpack.c.b16 %v676, %v668
        %v773 = vpack.c.b16 %v677, %v669
        %v774 = vpack.c.b16 %v678, %v670
        %v775 = vpack.c.b16 %v679, %v671
        %v776 = vpack.c.b16 %v688, %v680
        %v777 = vpack.c.b16 %v689, %v681
        %v778 = vpack.c.b16 %v690, %v682
        %v779 = vpack.c.b16 %v691, %v683
        %v780 = vpack.c.b16 %v692, %v684
        %v781 = vpack.c.b16 %v693, %v685
        %v782 = vpack.c.b16 %v694, %v686
        %v783 = vpack.c.b16 %v695, %v687
        %v784 = vpack.c.b16 %v704, %v696
        %v785 = vpack.c.b16 %v705, %v697
        %v786 = vpack.c.b16 %v706, %v698
        %v787 = vpack.c.b16 %v707, %v699
        %v788 = vpack.c.b16 %v708, %v700
        %v789 = vpack.c.b16 %v709, %v701
        %v790 = vpack.c.b16 %v710, %v702
        %v791 = vpack.c.b16 %v711, %v703
        %v792 = vpack.c.b16 %v712, %v712
        %v793 = vpack.c.b16 %v713, %v713
        %v794 = vpack.c.b16 %v714, %v714
        %v795 = vpack.c.b16 %v715, %v715
        %v796 = vpack.c.b16 %v716, %v716
        %v797 = vpack.c.b16 %v717, %v717
        %v798 = vpack.c.b16 %v718, %v718
        %v799 = vpack.c.b16 %v719, %v719
        %v1008 = vunpack.c.l.b16 %v352
        %v1009 = vunpack.c.h.b16 %v352
        %v1010 = vunpack.c.l.b16 %v353
        %v1011 = vunpack.c.h.b16 %v353
        %v1012 = vunpack.c.l.b16 %v354
        %v1013 = vunpack.c.h.b16 %v354
        %v1014 = vunpack.c.l.b16 %v355
        %v1015 = vunpack.c.h.b16 %v355
        %v1016 = vunpack.c.l.b16 %v356
        %v1017 = vunpack.c.h.b16 %v356
        %v1018 = vunpack.c.l.b16 %v357
        %v1019 = vunpack.c.h.b16 %v357
        %v1020 = vunpack.c.l.b16 %v358
        %v1021 = vunpack.c.h.b16 %v358
        %v1022 = vunpack.c.l.b16 %v359
        %v1023 = vunpack.c.h.b16 %v359
        %v1024 = vunpack.c.l.b16 %v360
        %v1025 = vunpack.c.h.b16 %v360
        %v1026 = vunpack.c.l.b16 %v361
        %v1027 = vunpack.c.h.b16 %v361
        %v1028 = vunpack.c.l.b16 %v362
        %v1029 = vunpack.c.h.b16 %v362
        %v1030 = vunpack.c.l.b16 %v363
        %v1031 = vunpack.c.h.b16 %v363
        %v1032 = vunpack.c.l.b16 %v364
        %v1033 = vunpack.c.h.b16 %v364
        %v1034 = vunpack.c.l.b16 %v365
        %v1035 = vunpack.c.h.b16 %v365
        %v1036 = vunpack.c.l.b16 %v366
        %v1037 = vunpack.c.h.b16 %v366
        %v1038 = vunpack.c.l.b16 %v367
        %v1039 = vunpack.c.h.b16 %v367
        %v1040 = vunpack.c.l.b16 %v368
        %v1041 = vunpack.c.h.b16 %v368
        %v1042 = vunpack.c.l.b16 %v369
        %v1043 = vunpack.c.h.b16 %v369
        %v1044 = vunpack.c.l.b16 %v370
        %v1045 = vunpack.c.h.b16 %v370
        %v1046 = vunpack.c.l.b16 %v371
        %v1047 = vunpack.c.h.b16 %v371
        %v1048 = vunpack.c.l.b16 %v372
        %v1049 = vunpack.c.h.b16 %v372
        %v1050 = vunpack.c.l.b16 %v373
        %v1051 = vunpack.c.h.b16 %v373
        %v1052 = vunpack.c.l.b16 %v374
        %v1053 = vunpack.c.h.b16 %v374
        %v1054 = vunpack.c.l.b16 %v375
        %v1055 = vunpack.c.h.b16 %v375
        %v1056 = vunpack.c.l.b16 %v376
        %v1057 = vunpack.c.h.b16 %v376
        %v1058 = vunpack.c.l.b16 %v377
        %v1059 = vunpack.c.h.b16 %v377
        %v1060 = vunpack.c.l.b16 %v378
        %v1061 = vunpack.c.h.b16 %v378
        %v1062 = vunpack.c.l.b16 %v379
        %v1063 = vunpack.c.h.b16 %v379
        %v1064 = vunpack.c.l.b16 %v380
        %v1065 = vunpack.c.h.b16 %v380
        %v1066 = vunpack.c.l.b16 %v381
        %v1067 = vunpack.c.h.b16 %v381
        %v1068 = vunpack.c.l.b16 %v382
        %v1069 = vunpack.c.h.b16 %v382
        %v1070 = vunpack.c.l.b16 %v383
        %v1071 = vunpack.c.h.b16 %v383
        %v1072 = vunpack.c.l.b16 %v384
        %v1073 = vunpack.c.h.b16 %v384
        %v1074 = vunpack.c.l.b16 %v385
        %v1075 = vunpack.c.h.b16 %v385
        %v1076 = vunpack.c.l.b16 %v386
        %v1077 = vunpack.c.h.b16 %v386
        %v1078 = vunpack.c.l.b16 %v387
        %v1079 = vunpack.c.h.b16 %v387
        %v1080 = vunpack.c.l.b16 %v388
        %v1081 = vunpack.c.h.b16 %v388
        %v1082 = vunpack.c.l.b16 %v389
        %v1083 = vunpack.c.h.b16 %v389
        %v1084 = vunpack.c.l.b16 %v390
        %v1085 = vunpack.c.h.b16 %v390
        %v1086 = vunpack.c.l.b16 %v391
        %v1087 = vunpack.c.h.b16 %v391
        %v1088 = vunpack.c.l.b16 %v392
        %v1089 = vunpack.c.h.b16 %v392
        %v1090 = vunpack.c.l.b16 %v393
        %v1091 = vunpack.c.h.b16 %v393
        %v1092 = vunpack.c.l.b16 %v394
        %v1093 = vunpack.c.h.b16 %v394
        %v1094 = vunpack.c.l.b16 %v395
        %v1095 = vunpack.c.h.b16 %v395
        %v1096 = vunpack.c.l.b16 %v396
        %v1097 = vunpack.c.h.b16 %v396
        %v1098 = vunpack.c.l.b16 %v397
        %v1099 = vunpack.c.h.b16 %v397
        %v1100 = vunpack.c.l.b16 %v398
        %v1101 = vunpack.c.h.b16 %v398
        %v1102 = vunpack.c.l.b16 %v399
        %v1103 = vunpack.c.h.b16 %v399
        %v1104 = vunpack.c.l.b16 %v400
        %v1105 = vunpack.c.h.b16 %v400
        %v1106 = vunpack.c.l.b16 %v401
        %v1107 = vunpack.c.h.b16 %v401
        %v1108 = vunpack.c.l.b16 %v402
        %v1109 = vunpack.c.h.b16 %v402
        %v1110 = vunpack.c.l.b16 %v403
        %v1111 = vunpack.c.h.b16 %v403
        %v1112 = vunpack.c.l.b16 %v404
        %v1113 = vunpack.c.h.b16 %v404
        %v1114 = vunpack.c.l.b16 %v405
        %v1115 = vunpack.c.h.b16 %v405
        %v1116 = vunpack.c.l.b16 %v406
        %v1117 = vunpack.c.h.b16 %v406
        %v1118 = vunpack.c.l.b16 %v407
        %v1119 = vunpack.c.h.b16 %v407
        %v1120 = vunpack.c.l.b16 %v408
        %v1121 = vunpack.c.h.b16 %v408
        %v1122 = vunpack.c.l.b16 %v409
        %v1123 = vunpack.c.h.b16 %v409
        %v1124 = vunpack.c.l.b16 %v410
        %v1125 = vunpack.c.h.b16 %v410
        %v1126 = vunpack.c.l.b16 %v411
        %v1127 = vunpack.c.h.b16 %v411
        %v1128 = vunpack.c.l.b16 %v412
        %v1129 = vunpack.c.h.b16 %v412
        %v1130 = vunpack.c.l.b16 %v413
        %v1131 = vunpack.c.h.b16 %v413
        %v1132 = vunpack.c.l.b16 %v414
        %v1133 = vunpack.c.h.b16 %v414
        %v1134 = vunpack.c.l.b16 %v415
        %v1135 = vunpack.c.h.b16 %v415
        %v1136 = vunpack.c.l.b16 %v416
        %v1137 = vunpack.c.h.b16 %v416
        %v1138 = vunpack.c.l.b16 %v417
        %v1139 = vunpack.c.h.b16 %v417
        %v1140 = vunpack.c.l.b16 %v418
        %v1141 = vunpack.c.h.b16 %v418
        %v1142 = vunpack.c.l.b16 %v419
        %v1143 = vunpack.c.h.b16 %v419
        %v1144 = vunpack.c.l.b16 %v420
        %v1145 = vunpack.c.h.b16 %v420
        %v1146 = vunpack.c.l.b16 %v421
        %v1147 = vunpack.c.h.b16 %v421
        %v1148 = vunpack.c.l.b16 %v422
        %v1149 = vunpack.c.h.b16 %v422
        %v1150 = vunpack.c.l.b16 %v423
        %v1151 = vunpack.c.h.b16 %v423
        %v1152 = vunpack.c.l.b16 %v424
        %v1153 = vunpack.c.h.b16 %v424
        %v1154 = vunpack.c.l.b16 %v425
        %v1155 = vunpack.c.h.b16 %v425
        %v1156 = vunpack.c.l.b16 %v426
        %v1157 = vunpack.c.h.b16 %v426
        %v1158 = vunpack.c.l.b16 %v427
        %v1159 = vunpack.c.h.b16 %v427
        %v1160 = vunpack.c.l.b16 %v428
        %v1161 = vunpack.c.h.b16 %v428
        %v1162 = vunpack.c.l.b16 %v429
        %v1163 = vunpack.c.h.b16 %v429
        %v1164 = vunpack.c.l.b16 %v430
        %v1165 = vunpack.c.h.b16 %v430
        %v1166 = vunpack.c.l.b16 %v431
        %v1167 = vunpack.c.h.b16 %v431
        %v1168 = vunpack.c.l.b16 %v432
        %v1169 = vunpack.c.h.b16 %v432
        %v1170 = vunpack.c.l.b16 %v433
        %v1171 = vunpack.c.h.b16 %v433
        %v1172 = vunpack.c.l.b16 %v434
        %v1173 = vunpack.c.h.b16 %v434
        %v1174 = vunpack.c.l.b16 %v435
        %v1175 = vunpack.c.h.b16 %v435
        %v1176 = vunpack.c.l.b16 %v436
        %v1177 = vunpack.c.h.b16 %v436
        %v1178 = vunpack.c.l.b16 %v437
        %v1179 = vunpack.c.h.b16 %v437
        %v1180 = vunpack.c.l.b16 %v438
        %v1181 = vunpack.c.h.b16 %v438
        %v1182 = vunpack.c.l.b16 %v439
        %v1183 = vunpack.c.h.b16 %v439
        %v1184 = vunpack.c.l.b16 %v440
        %v1185 = vunpack.c.h.b16 %v440
        %v1186 = vunpack.c.l.b16 %v441
        %v1187 = vunpack.c.h.b16 %v441
        %v1188 = vunpack.c.l.b16 %v442
        %v1189 = vunpack.c.h.b16 %v442
        %v1190 = vunpack.c.l.b16 %v443
        %v1191 = vunpack.c.h.b16 %v443
        %v1192 = vunpack.c.l.b16 %v444
        %v1193 = vunpack.c.h.b16 %v444
        %v1194 = vunpack.c.l.b16 %v445
        %v1195 = vunpack.c.h.b16 %v445
        %v1196 = vunpack.c.l.b16 %v446
        %v1197 = vunpack.c.h.b16 %v446
        %v1198 = vunpack.c.l.b16 %v447
        %v1199 = vunpack.c.h.b16 %v447
        %v1200 = vunpack.c.l.b16 %v448
        %v1201 = vunpack.c.h.b16 %v448
        %v1202 = vunpack.c.l.b16 %v449
        %v1203 = vunpack.c.h.b16 %v449
        %v1204 = vunpack.c.l.b16 %v450
        %v1205 = vunpack.c.h.b16 %v450
        %v1206 = vunpack.c.l.b16 %v451
        %v1207 = vunpack.c.h.b16 %v451
        %v1208 = vunpack.c.l.b16 %v452
        %v1209 = vunpack.c.h.b16 %v452
        %v1210 = vunpack.c.l.b16 %v453
        %v1211 = vunpack.c.h.b16 %v453
        %v1212 = vunpack.c.l.b16 %v454
        %v1213 = vunpack.c.h.b16 %v454
        %v1214 = vunpack.c.l.b16 %v455
        %v1215 = vunpack.c.h.b16 %v455
        %v1216 = vunpack.c.l.b16 %v456
        %v1217 = vunpack.c.h.b16 %v456
        %v1218 = vunpack.c.l.b16 %v457
        %v1219 = vunpack.c.h.b16 %v457
        %v1220 = vunpack.c.l.b16 %v458
        %v1221 = vunpack.c.h.b16 %v458
        %v1222 = vunpack.c.l.b16 %v459
        %v1223 = vunpack.c.h.b16 %v459
        %v1224 = vunpack.c.l.b16 %v460
        %v1225 = vunpack.c.h.b16 %v460
        %v1226 = vunpack.c.l.b16 %v461
        %v1227 = vunpack.c.h.b16 %v461
        %v1228 = vunpack.c.l.b16 %v462
        %v1229 = vunpack.c.h.b16 %v462
        %v1230 = vunpack.c.l.b16 %v463
        %v1231 = vunpack.c.h.b16 %v463
        %v1232 = vunpack.c.l.b16 %v464
        %v1233 = vunpack.c.h.b16 %v464
        %v1234 = vunpack.c.l.b16 %v465
        %v1235 = vunpack.c.h.b16 %v465
        %v1236 = vunpack.c.l.b16 %v466
        %v1237 = vunpack.c.h.b16 %v466
        %v1238 = vunpack.c.l.b16 %v467
        %v1239 = vunpack.c.h.b16 %v467
        %v1240 = vunpack.c.l.b16 %v468
        %v1241 = vunpack.c.h.b16 %v468
        %v1242 = vunpack.c.l.b16 %v469
        %v1243 = vunpack.c.h.b16 %v469
        %v1244 = vunpack.c.l.b16 %v470
        %v1245 = vunpack.c.h.b16 %v470
        %v1246 = vunpack.c.l.b16 %v471
        %v1247 = vunpack.c.h.b16 %v471
        %v1248 = vunpack.c.l.b16 %v472
        %v1249 = vunpack.c.h.b16 %v472
        %v1250 = vunpack.c.l.b16 %v473
        %v1251 = vunpack.c.h.b16 %v473
        %v1252 = vunpack.c.l.b16 %v474
        %v1253 = vunpack.c.h.b16 %v474
        %v1254 = vunpack.c.l.b16 %v475
        %v1255 = vunpack.c.h.b16 %v475
        %v1256 = vunpack.c.l.b16 %v476
        %v1257 = vunpack.c.h.b16 %v476
        %v1258 = vunpack.c.l.b16 %v477
        %v1259 = vunpack.c.h.b16 %v477
        %v1260 = vunpack.c.l.b16 %v478
        %v1261 = vunpack.c.h.b16 %v478
        %v1262 = vunpack.c.l.b16 %v479
        %v1263 = vunpack.c.h.b16 %v479
        %v1264 = vpack.c.b16 %v1010, %v1008
        %v1265 = vpack.c.b16 %v1011, %v1009
        %v1266 = vpack.c.b16 %v1014, %v1012
        %v1267 = vpack.c.b16 %v1015, %v1013
        %v1268 = vpack.c.b16 %v1018, %v1016
        %v1269 = vpack.c.b16 %v1019, %v1017
        %v1270 = vpack.c.b16 %v1022, %v1020
        %v1271 = vpack.c.b16 %v1023, %v1021
        %v1272 = vpack.c.b16 %v1026, %v1024
        %v1273 = vpack.c.b16 %v1027, %v1025
        %v1274 = vpack.c.b16 %v1030, %v1028
        %v1275 = vpack.c.b16 %v1031, %v1029
        %v1276 = vpack.c.b16 %v1034, %v1032
        %v1277 = vpack.c.b16 %v1035, %v1033
        %v1278 = vpack.c.b16 %v1038, %v1036
        %v1279 = vpack.c.b16 %v1039, %v1037
        %v1280 = vpack.c.b16 %v1042, %v1040
        %v1281 = vpack.c.b16 %v1043, %v1041
        %v1282 = vpack.c.b16 %v1046, %v1044
        %v1283 = vpack.c.b16 %v1047, %v1045
        %v1284 = vpack.c.b16 %v1050, %v1048
        %v1285 = vpack.c.b16 %v1051, %v1049
        %v1286 = vpack.c.b16 %v1054, %v1052
        %v1287 = vpack.c.b16 %v1055, %v1053
        %v1288 = vpack.c.b16 %v1058, %v1056
        %v1289 = vpack.c.b16 %v1059, %v1057
        %v1290 = vpack.c.b16 %v1062, %v1060
        %v1291 = vpack.c.b16 %v1063, %v1061
        %v1292 = vpack.c.b16 %v1066, %v1064
        %v1293 = vpack.c.b16 %v1067, %v1065
        %v1294 = vpack.c.b16 %v1070, %v1068
        %v1295 = vpack.c.b16 %v1071, %v1069
        %v1296 = vpack.c.b16 %v1074, %v1072
        %v1297 = vpack.c.b16 %v1075, %v1073
        %v1298 = vpack.c.b16 %v1078, %v1076
        %v1299 = vpack.c.b16 %v1079, %v1077
        %v1300 = vpack.c.b16 %v1082, %v1080
        %v1301 = vpack.c.b16 %v1083, %v1081
        %v1302 = vpack.c.b16 %v1086, %v1084
        %v1303 = vpack.c.b16 %v1087, %v1085
        %v1304 = vpack.c.b16 %v1090, %v1088
        %v1305 = vpack.c.b16 %v1091, %v1089
        %v1306 = vpack.c.b16 %v1094, %v1092
        %v1307 = vpack.c.b16 %v1095, %v1093
        %v1308 = vpack.c.b16 %v1098, %v1096
        %v1309 = vpack.c.b16 %v1099, %v1097
        %v1310 = vpack.c.b16 %v1102, %v1100
        %v1311 = vpack.c.b16 %v1103, %v1101
        %v1312 = vpack.c.b16 %v1106, %v1104
        %v1313 = vpack.c.b16 %v1107, %v1105
        %v1314 = vpack.c.b16 %v1110, %v1108
        %v1315 = vpack.c.b16 %v1111, %v1109
        %v1316 = vpack.c.b16 %v1114, %v1112
        %v1317 = vpack.c.b16 %v1115, %v1113
        %v1318 = vpack.c.b16 %v1118, %v1116
        %v1319 = vpack.c.b16 %v1119, %v1117
        %v1320 = vpack.c.b16 %v1122, %v1120
        %v1321 = vpack.c.b16 %v1123, %v1121
        %v1322 = vpack.c.b16 %v1126, %v1124
        %v1323 = vpack.c.b16 %v1127, %v1125
        %v1324 = vpack.c.b16 %v1130, %v1128
        %v1325 = vpack.c.b16 %v1131, %v1129
        %v1326 = vpack.c.b16 %v1134, %v1132
        %v1327 = vpack.c.b16 %v1135, %v1133
        %v1328 = vpack.c.b16 %v1138, %v1136
        %v1329 = vpack.c.b16 %v1139, %v1137
        %v1330 = vpack.c.b16 %v1142, %v1140
        %v1331 = vpack.c.b16 %v1143, %v1141
        %v1332 = vpack.c.b16 %v1146, %v1144
        %v1333 = vpack.c.b16 %v1147, %v1145
        %v1334 = vpack.c.b16 %v1150, %v1148
        %v1335 = vpack.c.b16 %v1151, %v1149
        %v1336 = vpack.c.b16 %v1154, %v1152
        %v1337 = vpack.c.b16 %v1155, %v1153
        %v1338 = vpack.c.b16 %v1158, %v1156
        %v1339 = vpack.c.b16 %v1159, %v1157
        %v1340 = vpack.c.b16 %v1162, %v1160
        %v1341 = vpack.c.b16 %v1163, %v1161
        %v1342 = vpack.c.b16 %v1166, %v1164
        %v1343 = vpack.c.b16 %v1167, %v1165
        %v1344 = vpack.c.b16 %v1170, %v1168
        %v1345 = vpack.c.b16 %v1171, %v1169
        %v1346 = vpack.c.b16 %v1174, %v1172
        %v1347 = vpack.c.b16 %v1175, %v1173
        %v1348 = vpack.c.b16 %v1178, %v1176
        %v1349 = vpack.c.b16 %v1179, %v1177
        %v1350 = vpack.c.b16 %v1182, %v1180
        %v1351 = vpack.c.b16 %v1183, %v1181
        %v1352 = vpack.c.b16 %v1186, %v1184
        %v1353 = vpack.c.b16 %v1187, %v1185
        %v1354 = vpack.c.b16 %v1190, %v1188
        %v1355 = vpack.c.b16 %v1191, %v1189
        %v1356 = vpack.c.b16 %v1194, %v1192
        %v1357 = vpack.c.b16 %v1195, %v1193
        %v1358 = vpack.c.b16 %v1198, %v1196
        %v1359 = vpack.c.b16 %v1199, %v1197
        %v1360 = vpack.c.b16 %v1202, %v1200
        %v1361 = vpack.c.b16 %v1203, %v1201
        %v1362 = vpack.c.b16 %v1206, %v1204
        %v1363 = vpack.c.b16 %v1207, %v1205
        %v1364 = vpack.c.b16 %v1210, %v1208
        %v1365 = vpack.c.b16 %v1211, %v1209
        %v1366 = vpack.c.b16 %v1214, %v1212
        %v1367 = vpack.c.b16 %v1215, %v1213
        %v1368 = vpack.c.b16 %v1218, %v1216
        %v1369 = vpack.c.b16 %v1219, %v1217
        %v1370 = vpack.c.b16 %v1222, %v1220
        %v1371 = vpack.c.b16 %v1223, %v1221
        %v1372 = vpack.c.b16 %v1226, %v1224
        %v1373 = vpack.c.b16 %v1227, %v1225
        %v1374 = vpack.c.b16 %v1230, %v1228
        %v1375 = vpack.c.b16 %v1231, %v1229
        %v1376 = vpack.c.b16 %v1234, %v1232
        %v1377 = vpack.c.b16 %v1235, %v1233
        %v1378 = vpack.c.b16 %v1238, %v1236
        %v1379 = vpack.c.b16 %v1239, %v1237
        %v1380 = vpack.c.b16 %v1242, %v1240
        %v1381 = vpack.c.b16 %v1243, %v1241
        %v1382 = vpack.c.b16 %v1246, %v1244
        %v1383 = vpack.c.b16 %v1247, %v1245
        %v1384 = vpack.c.b16 %v1250, %v1248
        %v1385 = vpack.c.b16 %v1251, %v1249
        %v1386 = vpack.c.b16 %v1254, %v1252
        %v1387 = vpack.c.b16 %v1255, %v1253
        %v1388 = vpack.c.b16 %v1258, %v1256
        %v1389 = vpack.c.b16 %v1259, %v1257
        %v1390 = vpack.c.b16 %v1262, %v1260
        %v1391 = vpack.c.b16 %v1263, %v1261
        %1520 = vmatprep.subr.bf16.mxu0 %v1279
        %1521 = vmatpush1.bf16.msra.mxu0 %v1278
        %1522 = vmatprep.subr.bf16.mxu0 %v1277
        %1523 = vmatpush1.bf16.msra.mxu0 %v1276
        %1524 = vmatprep.subr.bf16.mxu0 %v1275
        %1525 = vmatpush1.bf16.msra.mxu0 %v1274
        %1526 = vmatprep.subr.bf16.mxu0 %v1273
        %1527 = vmatpush1.bf16.msra.mxu0 %v1272
        %1528 = vmatprep.subr.bf16.mxu0 %v1271
        %1529 = vmatpush1.bf16.msra.mxu0 %v1270
        %1530 = vmatprep.subr.bf16.mxu0 %v1269
        %1531 = vmatpush1.bf16.msra.mxu0 %v1268
        %1532 = vmatprep.subr.bf16.mxu0 %v1267
        %1533 = vmatpush1.bf16.msra.mxu0 %v1266
        %1534 = vmatprep.subr.bf16.mxu0 %v1265
        %1535 = vmatpush1.bf16.msra.mxu0 %v1264
        %1536 = vmatprep.subr.bf16.mxu0 %v1295
        %1537 = vmatpush2.bf16.msra.mxu0 %v1294
        %1538 = vmatprep.subr.bf16.mxu0 %v1293
        %1539 = vmatpush2.bf16.msra.mxu0 %v1292
        %1540 = vmatprep.subr.bf16.mxu0 %v1291
        %1541 = vmatpush2.bf16.msra.mxu0 %v1290
        %1542 = vmatprep.subr.bf16.mxu0 %v1289
        %1543 = vmatpush2.bf16.msra.mxu0 %v1288
        %1544 = vmatprep.subr.bf16.mxu0 %v1287
        %1545 = vmatpush2.bf16.msra.mxu0 %v1286
        %1546 = vmatprep.subr.bf16.mxu0 %v1285
        %1547 = vmatpush2.bf16.msra.mxu0 %v1284
        %1548 = vmatprep.subr.bf16.mxu0 %v1283
        %1549 = vmatpush2.bf16.msra.mxu0 %v1282
        %1550 = vmatprep.subr.bf16.mxu0 %v1281
        %1551 = vmatpush2.bf16.msra.mxu0 %v1280
        %1552 = vmatprep.mubr.bf16.mxu0 %v721
        %1553 = vmatmul.mubr.bf16.gmra.mxu0 %v720
        %v1554 = vpop.f32.mrf.mxu0
        %v1555 = vadd.f32 %v485, %v1554
        %v1556 = vpop.f32.mrf.mxu0
        %v1557 = vadd.f32 %v489, %v1556
        %v1558 = vpop.f32.mrf.mxu0
        %v1559 = vadd.f32 %v485, %v1558
        %v1560 = vpop.f32.mrf.mxu0
        %v1561 = vadd.f32 %v489, %v1560
        %1562 = vmatprep.mubr.bf16.mxu0 %v729
        %1563 = vmatmul.mubr.bf16.gmra.mxu0 %v728
        %v1564 = vpop.f32.mrf.mxu0
        %v1565 = vadd.f32 %v485, %v1564
        %v1566 = vpop.f32.mrf.mxu0
        %v1567 = vadd.f32 %v489, %v1566
        %v1568 = vpop.f32.mrf.mxu0
        %v1569 = vadd.f32 %v485, %v1568
        %v1570 = vpop.f32.mrf.mxu0
        %v1571 = vadd.f32 %v489, %v1570
        %1572 = vmatprep.mubr.bf16.mxu0 %v737
        %1573 = vmatmul.mubr.bf16.gmra.mxu0 %v736
        %v1574 = vpop.f32.mrf.mxu0
        %v1575 = vadd.f32 %v485, %v1574
        %v1576 = vpop.f32.mrf.mxu0
        %v1577 = vadd.f32 %v489, %v1576
        %v1578 = vpop.f32.mrf.mxu0
        %v1579 = vadd.f32 %v485, %v1578
        %v1580 = vpop.f32.mrf.mxu0
        %v1581 = vadd.f32 %v489, %v1580
        %1582 = vmatprep.mubr.bf16.mxu0 %v745
        %1583 = vmatmul.mubr.bf16.gmra.mxu0 %v744
        %v1584 = vpop.f32.mrf.mxu0
        %v1585 = vadd.f32 %v485, %v1584
        %v1586 = vpop.f32.mrf.mxu0
        %v1587 = vadd.f32 %v489, %v1586
        %v1588 = vpop.f32.mrf.mxu0
        %v1589 = vadd.f32 %v485, %v1588
        %v1590 = vpop.f32.mrf.mxu0
        %v1591 = vadd.f32 %v489, %v1590
        %1592 = vmatprep.mubr.bf16.mxu0 %v753
        %1593 = vmatmul.mubr.bf16.gmra.mxu0 %v752
        %v1594 = vpop.f32.mrf.mxu0
        %v1595 = vadd.f32 %v485, %v1594
        %v1596 = vpop.f32.mrf.mxu0
        %v1597 = vadd.f32 %v489, %v1596
        %v1598 = vpop.f32.mrf.mxu0
        %v1599 = vadd.f32 %v485, %v1598
        %v1600 = vpop.f32.mrf.mxu0
        %v1601 = vadd.f32 %v489, %v1600
        %1602 = vmatprep.mubr.bf16.mxu0 %v761
        %1603 = vmatmul.mubr.bf16.gmra.mxu0 %v760
        %v1604 = vpop.f32.mrf.mxu0
        %v1605 = vadd.f32 %v485, %v1604
        %v1606 = vpop.f32.mrf.mxu0
        %v1607 = vadd.f32 %v489, %v1606
        %v1608 = vpop.f32.mrf.mxu0
        %v1609 = vadd.f32 %v485, %v1608
        %v1610 = vpop.f32.mrf.mxu0
        %v1611 = vadd.f32 %v489, %v1610
        %1612 = vmatprep.mubr.bf16.mxu0 %v769
        %1613 = vmatmul.mubr.bf16.gmra.mxu0 %v768
        %v1614 = vpop.f32.mrf.mxu0
        %v1615 = vadd.f32 %v485, %v1614
        %v1616 = vpop.f32.mrf.mxu0
        %v1617 = vadd.f32 %v489, %v1616
        %v1618 = vpop.f32.mrf.mxu0
        %v1619 = vadd.f32 %v485, %v1618
        %v1620 = vpop.f32.mrf.mxu0
        %v1621 = vadd.f32 %v489, %v1620
        %1622 = vmatprep.mubr.bf16.mxu0 %v777
        %1623 = vmatmul.mubr.bf16.gmra.mxu0 %v776
        %v1624 = vpop.f32.mrf.mxu0
        %v1625 = vadd.f32 %v485, %v1624
        %v1626 = vpop.f32.mrf.mxu0
        %v1627 = vadd.f32 %v489, %v1626
        %v1628 = vpop.f32.mrf.mxu0
        %v1629 = vadd.f32 %v485, %v1628
        %v1630 = vpop.f32.mrf.mxu0
        %v1631 = vadd.f32 %v489, %v1630
        %1632 = vmatprep.mubr.bf16.mxu0 %v785
        %1633 = vmatmul.mubr.bf16.gmra.mxu0 %v784
        %v1634 = vpop.f32.mrf.mxu0
        %v1635 = vadd.f32 %v485, %v1634
        %v1636 = vpop.f32.mrf.mxu0
        %v1637 = vadd.f32 %v489, %v1636
        %v1638 = vpop.f32.mrf.mxu0
        %v1639 = vadd.f32 %v485, %v1638
        %v1640 = vpop.f32.mrf.mxu0
        %v1641 = vadd.f32 %v489, %v1640
        %1642 = vmatprep.mubr.bf16.mxu0 %v793
        %1643 = vmatmul.mubr.bf16.gmra.mxu0 %v792
        %v1644 = vpop.f32.mrf.mxu0
        %v1645 = vadd.f32 %v485, %v1644
        %v1646 = vpop.f32.mrf.mxu0
        %v1647 = vadd.f32 %v489, %v1646
        %v1648 = vpop.f32.mrf.mxu0
        %v1649 = vpop.f32.mrf.mxu0
        %1650 = vdwg.mxu0
        %1651 = vmatprep.subr.bf16.mxu0 %v1311
        %1652 = vmatpush1.bf16.msra.mxu0 %v1310
        %1653 = vmatprep.subr.bf16.mxu0 %v1309
        %1654 = vmatpush1.bf16.msra.mxu0 %v1308
        %1655 = vmatprep.subr.bf16.mxu0 %v1307
        %1656 = vmatpush1.bf16.msra.mxu0 %v1306
        %1657 = vmatprep.subr.bf16.mxu0 %v1305
        %1658 = vmatpush1.bf16.msra.mxu0 %v1304
        %1659 = vmatprep.subr.bf16.mxu0 %v1303
        %1660 = vmatpush1.bf16.msra.mxu0 %v1302
        %1661 = vmatprep.subr.bf16.mxu0 %v1301
        %1662 = vmatpush1.bf16.msra.mxu0 %v1300
        %1663 = vmatprep.subr.bf16.mxu0 %v1299
        %1664 = vmatpush1.bf16.msra.mxu0 %v1298
        %1665 = vmatprep.subr.bf16.mxu0 %v1297
        %1666 = vmatpush1.bf16.msra.mxu0 %v1296
        %1667 = vmatprep.subr.bf16.mxu0 %v1327
        %1668 = vmatpush2.bf16.msra.mxu0 %v1326
        %1669 = vmatprep.subr.bf16.mxu0 %v1325
        %1670 = vmatpush2.bf16.msra.mxu0 %v1324
        %1671 = vmatprep.subr.bf16.mxu0 %v1323
        %1672 = vmatpush2.bf16.msra.mxu0 %v1322
        %1673 = vmatprep.subr.bf16.mxu0 %v1321
        %1674 = vmatpush2.bf16.msra.mxu0 %v1320
        %1675 = vmatprep.subr.bf16.mxu0 %v1319
        %1676 = vmatpush2.bf16.msra.mxu0 %v1318
        %1677 = vmatprep.subr.bf16.mxu0 %v1317
        %1678 = vmatpush2.bf16.msra.mxu0 %v1316
        %1679 = vmatprep.subr.bf16.mxu0 %v1315
        %1680 = vmatpush2.bf16.msra.mxu0 %v1314
        %1681 = vmatprep.subr.bf16.mxu0 %v1313
        %1682 = vmatpush2.bf16.msra.mxu0 %v1312
        %1683 = vmatprep.mubr.bf16.mxu0 %v723
        %1684 = vmatmul.mubr.bf16.gmra.mxu0 %v722
        %v1685 = vpop.f32.mrf.mxu0
        %v1686 = vadd.f32 %v1555, %v1685
        %v1687 = vpop.f32.mrf.mxu0
        %v1688 = vadd.f32 %v1557, %v1687
        %v1689 = vpop.f32.mrf.mxu0
        %v1690 = vadd.f32 %v1559, %v1689
        %v1691 = vpop.f32.mrf.mxu0
        %v1692 = vadd.f32 %v1561, %v1691
        %1693 = vmatprep.mubr.bf16.mxu0 %v731
        %1694 = vmatmul.mubr.bf16.gmra.mxu0 %v730
        %v1695 = vpop.f32.mrf.mxu0
        %v1696 = vadd.f32 %v1565, %v1695
        %v1697 = vpop.f32.mrf.mxu0
        %v1698 = vadd.f32 %v1567, %v1697
        %v1699 = vpop.f32.mrf.mxu0
        %v1700 = vadd.f32 %v1569, %v1699
        %v1701 = vpop.f32.mrf.mxu0
        %v1702 = vadd.f32 %v1571, %v1701
        %1703 = vmatprep.mubr.bf16.mxu0 %v739
        %1704 = vmatmul.mubr.bf16.gmra.mxu0 %v738
        %v1705 = vpop.f32.mrf.mxu0
        %v1706 = vadd.f32 %v1575, %v1705
        %v1707 = vpop.f32.mrf.mxu0
        %v1708 = vadd.f32 %v1577, %v1707
        %v1709 = vpop.f32.mrf.mxu0
        %v1710 = vadd.f32 %v1579, %v1709
        %v1711 = vpop.f32.mrf.mxu0
        %v1712 = vadd.f32 %v1581, %v1711
        %1713 = vmatprep.mubr.bf16.mxu0 %v747
        %1714 = vmatmul.mubr.bf16.gmra.mxu0 %v746
        %v1715 = vpop.f32.mrf.mxu0
        %v1716 = vadd.f32 %v1585, %v1715
        %v1717 = vpop.f32.mrf.mxu0
        %v1718 = vadd.f32 %v1587, %v1717
        %v1719 = vpop.f32.mrf.mxu0
        %v1720 = vadd.f32 %v1589, %v1719
        %v1721 = vpop.f32.mrf.mxu0
        %v1722 = vadd.f32 %v1591, %v1721
        %1723 = vmatprep.mubr.bf16.mxu0 %v755
        %1724 = vmatmul.mubr.bf16.gmra.mxu0 %v754
        %v1725 = vpop.f32.mrf.mxu0
        %v1726 = vadd.f32 %v1595, %v1725
        %v1727 = vpop.f32.mrf.mxu0
        %v1728 = vadd.f32 %v1597, %v1727
        %v1729 = vpop.f32.mrf.mxu0
        %v1730 = vadd.f32 %v1599, %v1729
        %v1731 = vpop.f32.mrf.mxu0
        %v1732 = vadd.f32 %v1601, %v1731
        %1733 = vmatprep.mubr.bf16.mxu0 %v763
        %1734 = vmatmul.mubr.bf16.gmra.mxu0 %v762
        %v1735 = vpop.f32.mrf.mxu0
        %v1736 = vadd.f32 %v1605, %v1735
        %v1737 = vpop.f32.mrf.mxu0
        %v1738 = vadd.f32 %v1607, %v1737
        %v1739 = vpop.f32.mrf.mxu0
        %v1740 = vadd.f32 %v1609, %v1739
        %v1741 = vpop.f32.mrf.mxu0
        %v1742 = vadd.f32 %v1611, %v1741
        %1743 = vmatprep.mubr.bf16.mxu0 %v771
        %1744 = vmatmul.mubr.bf16.gmra.mxu0 %v770
        %v1745 = vpop.f32.mrf.mxu0
        %v1746 = vadd.f32 %v1615, %v1745
        %v1747 = vpop.f32.mrf.mxu0
        %v1748 = vadd.f32 %v1617, %v1747
        %v1749 = vpop.f32.mrf.mxu0
        %v1750 = vadd.f32 %v1619, %v1749
        %v1751 = vpop.f32.mrf.mxu0
        %v1752 = vadd.f32 %v1621, %v1751
        %1753 = vmatprep.mubr.bf16.mxu0 %v779
        %1754 = vmatmul.mubr.bf16.gmra.mxu0 %v778
        %v1755 = vpop.f32.mrf.mxu0
        %v1756 = vadd.f32 %v1625, %v1755
        %v1757 = vpop.f32.mrf.mxu0
        %v1758 = vadd.f32 %v1627, %v1757
        %v1759 = vpop.f32.mrf.mxu0
        %v1760 = vadd.f32 %v1629, %v1759
        %v1761 = vpop.f32.mrf.mxu0
        %v1762 = vadd.f32 %v1631, %v1761
        %1763 = vmatprep.mubr.bf16.mxu0 %v787
        %1764 = vmatmul.mubr.bf16.gmra.mxu0 %v786
        %v1765 = vpop.f32.mrf.mxu0
        %v1766 = vadd.f32 %v1635, %v1765
        %v1767 = vpop.f32.mrf.mxu0
        %v1768 = vadd.f32 %v1637, %v1767
        %v1769 = vpop.f32.mrf.mxu0
        %v1770 = vadd.f32 %v1639, %v1769
        %v1771 = vpop.f32.mrf.mxu0
        %v1772 = vadd.f32 %v1641, %v1771
        %1773 = vmatprep.mubr.bf16.mxu0 %v795
        %1774 = vmatmul.mubr.bf16.gmra.mxu0 %v794
        %v1775 = vpop.f32.mrf.mxu0
        %v1776 = vadd.f32 %v1645, %v1775
        %v1777 = vpop.f32.mrf.mxu0
        %v1778 = vadd.f32 %v1647, %v1777
        %v1779 = vpop.f32.mrf.mxu0
        %v1780 = vpop.f32.mrf.mxu0
        %1781 = vdwg.mxu0
        %1782 = vmatprep.subr.bf16.mxu0 %v1343
        %1783 = vmatpush1.bf16.msra.mxu0 %v1342
        %1784 = vmatprep.subr.bf16.mxu0 %v1341
        %1785 = vmatpush1.bf16.msra.mxu0 %v1340
        %1786 = vmatprep.subr.bf16.mxu0 %v1339
        %1787 = vmatpush1.bf16.msra.mxu0 %v1338
        %1788 = vmatprep.subr.bf16.mxu0 %v1337
        %1789 = vmatpush1.bf16.msra.mxu0 %v1336
        %1790 = vmatprep.subr.bf16.mxu0 %v1335
        %1791 = vmatpush1.bf16.msra.mxu0 %v1334
        %1792 = vmatprep.subr.bf16.mxu0 %v1333
        %1793 = vmatpush1.bf16.msra.mxu0 %v1332
        %1794 = vmatprep.subr.bf16.mxu0 %v1331
        %1795 = vmatpush1.bf16.msra.mxu0 %v1330
        %1796 = vmatprep.subr.bf16.mxu0 %v1329
        %1797 = vmatpush1.bf16.msra.mxu0 %v1328
        %1798 = vmatprep.subr.bf16.mxu0 %v1359
        %1799 = vmatpush2.bf16.msra.mxu0 %v1358
        %1800 = vmatprep.subr.bf16.mxu0 %v1357
        %1801 = vmatpush2.bf16.msra.mxu0 %v1356
        %1802 = vmatprep.subr.bf16.mxu0 %v1355
        %1803 = vmatpush2.bf16.msra.mxu0 %v1354
        %1804 = vmatprep.subr.bf16.mxu0 %v1353
        %1805 = vmatpush2.bf16.msra.mxu0 %v1352
        %1806 = vmatprep.subr.bf16.mxu0 %v1351
        %1807 = vmatpush2.bf16.msra.mxu0 %v1350
        %1808 = vmatprep.subr.bf16.mxu0 %v1349
        %1809 = vmatpush2.bf16.msra.mxu0 %v1348
        %1810 = vmatprep.subr.bf16.mxu0 %v1347
        %1811 = vmatpush2.bf16.msra.mxu0 %v1346
        %1812 = vmatprep.subr.bf16.mxu0 %v1345
        %1813 = vmatpush2.bf16.msra.mxu0 %v1344
        %1814 = vmatprep.mubr.bf16.mxu0 %v725
        %1815 = vmatmul.mubr.bf16.gmra.mxu0 %v724
        %v1816 = vpop.f32.mrf.mxu0
        %v1817 = vadd.f32 %v1686, %v1816
        %v1818 = vpop.f32.mrf.mxu0
        %v1819 = vadd.f32 %v1688, %v1818
        %v1820 = vpop.f32.mrf.mxu0
        %v1821 = vadd.f32 %v1690, %v1820
        %v1822 = vpop.f32.mrf.mxu0
        %v1823 = vadd.f32 %v1692, %v1822
        %1824 = vmatprep.mubr.bf16.mxu0 %v733
        %1825 = vmatmul.mubr.bf16.gmra.mxu0 %v732
        %v1826 = vpop.f32.mrf.mxu0
        %v1827 = vadd.f32 %v1696, %v1826
        %v1828 = vpop.f32.mrf.mxu0
        %v1829 = vadd.f32 %v1698, %v1828
        %v1830 = vpop.f32.mrf.mxu0
        %v1831 = vadd.f32 %v1700, %v1830
        %v1832 = vpop.f32.mrf.mxu0
        %v1833 = vadd.f32 %v1702, %v1832
        %1834 = vmatprep.mubr.bf16.mxu0 %v741
        %1835 = vmatmul.mubr.bf16.gmra.mxu0 %v740
        %v1836 = vpop.f32.mrf.mxu0
        %v1837 = vadd.f32 %v1706, %v1836
        %v1838 = vpop.f32.mrf.mxu0
        %v1839 = vadd.f32 %v1708, %v1838
        %v1840 = vpop.f32.mrf.mxu0
        %v1841 = vadd.f32 %v1710, %v1840
        %v1842 = vpop.f32.mrf.mxu0
        %v1843 = vadd.f32 %v1712, %v1842
        %1844 = vmatprep.mubr.bf16.mxu0 %v749
        %1845 = vmatmul.mubr.bf16.gmra.mxu0 %v748
        %v1846 = vpop.f32.mrf.mxu0
        %v1847 = vadd.f32 %v1716, %v1846
        %v1848 = vpop.f32.mrf.mxu0
        %v1849 = vadd.f32 %v1718, %v1848
        %v1850 = vpop.f32.mrf.mxu0
        %v1851 = vadd.f32 %v1720, %v1850
        %v1852 = vpop.f32.mrf.mxu0
        %v1853 = vadd.f32 %v1722, %v1852
        %1854 = vmatprep.mubr.bf16.mxu0 %v757
        %1855 = vmatmul.mubr.bf16.gmra.mxu0 %v756
        %v1856 = vpop.f32.mrf.mxu0
        %v1857 = vadd.f32 %v1726, %v1856
        %v1858 = vpop.f32.mrf.mxu0
        %v1859 = vadd.f32 %v1728, %v1858
        %v1860 = vpop.f32.mrf.mxu0
        %v1861 = vadd.f32 %v1730, %v1860
        %v1862 = vpop.f32.mrf.mxu0
        %v1863 = vadd.f32 %v1732, %v1862
        %1864 = vmatprep.mubr.bf16.mxu0 %v765
        %1865 = vmatmul.mubr.bf16.gmra.mxu0 %v764
        %v1866 = vpop.f32.mrf.mxu0
        %v1867 = vadd.f32 %v1736, %v1866
        %v1868 = vpop.f32.mrf.mxu0
        %v1869 = vadd.f32 %v1738, %v1868
        %v1870 = vpop.f32.mrf.mxu0
        %v1871 = vadd.f32 %v1740, %v1870
        %v1872 = vpop.f32.mrf.mxu0
        %v1873 = vadd.f32 %v1742, %v1872
        %1874 = vmatprep.mubr.bf16.mxu0 %v773
        %1875 = vmatmul.mubr.bf16.gmra.mxu0 %v772
        %v1876 = vpop.f32.mrf.mxu0
        %v1877 = vadd.f32 %v1746, %v1876
        %v1878 = vpop.f32.mrf.mxu0
        %v1879 = vadd.f32 %v1748, %v1878
        %v1880 = vpop.f32.mrf.mxu0
        %v1881 = vadd.f32 %v1750, %v1880
        %v1882 = vpop.f32.mrf.mxu0
        %v1883 = vadd.f32 %v1752, %v1882
        %1884 = vmatprep.mubr.bf16.mxu0 %v781
        %1885 = vmatmul.mubr.bf16.gmra.mxu0 %v780
        %v1886 = vpop.f32.mrf.mxu0
        %v1887 = vadd.f32 %v1756, %v1886
        %v1888 = vpop.f32.mrf.mxu0
        %v1889 = vadd.f32 %v1758, %v1888
        %v1890 = vpop.f32.mrf.mxu0
        %v1891 = vadd.f32 %v1760, %v1890
        %v1892 = vpop.f32.mrf.mxu0
        %v1893 = vadd.f32 %v1762, %v1892
        %1894 = vmatprep.mubr.bf16.mxu0 %v789
        %1895 = vmatmul.mubr.bf16.gmra.mxu0 %v788
        %v1896 = vpop.f32.mrf.mxu0
        %v1897 = vadd.f32 %v1766, %v1896
        %v1898 = vpop.f32.mrf.mxu0
        %v1899 = vadd.f32 %v1768, %v1898
        %v1900 = vpop.f32.mrf.mxu0
        %v1901 = vadd.f32 %v1770, %v1900
        %v1902 = vpop.f32.mrf.mxu0
        %v1903 = vadd.f32 %v1772, %v1902
        %1904 = vmatprep.mubr.bf16.mxu0 %v797
        %1905 = vmatmul.mubr.bf16.gmra.mxu0 %v796
        %v1906 = vpop.f32.mrf.mxu0
        %v1907 = vadd.f32 %v1776, %v1906
        %v1908 = vpop.f32.mrf.mxu0
        %v1909 = vadd.f32 %v1778, %v1908
        %v1910 = vpop.f32.mrf.mxu0
        %v1911 = vpop.f32.mrf.mxu0
        %1912 = vdwg.mxu0
        %1913 = vmatprep.subr.bf16.mxu0 %v1375
        %1914 = vmatpush1.bf16.msra.mxu0 %v1374
        %1915 = vmatprep.subr.bf16.mxu0 %v1373
        %1916 = vmatpush1.bf16.msra.mxu0 %v1372
        %1917 = vmatprep.subr.bf16.mxu0 %v1371
        %1918 = vmatpush1.bf16.msra.mxu0 %v1370
        %1919 = vmatprep.subr.bf16.mxu0 %v1369
        %1920 = vmatpush1.bf16.msra.mxu0 %v1368
        %1921 = vmatprep.subr.bf16.mxu0 %v1367
        %1922 = vmatpush1.bf16.msra.mxu0 %v1366
        %1923 = vmatprep.subr.bf16.mxu0 %v1365
        %1924 = vmatpush1.bf16.msra.mxu0 %v1364
        %1925 = vmatprep.subr.bf16.mxu0 %v1363
        %1926 = vmatpush1.bf16.msra.mxu0 %v1362
        %1927 = vmatprep.subr.bf16.mxu0 %v1361
        %1928 = vmatpush1.bf16.msra.mxu0 %v1360
        %1929 = vmatprep.subr.bf16.mxu0 %v1391
        %1930 = vmatpush2.bf16.msra.mxu0 %v1390
        %1931 = vmatprep.subr.bf16.mxu0 %v1389
        %1932 = vmatpush2.bf16.msra.mxu0 %v1388
        %1933 = vmatprep.subr.bf16.mxu0 %v1387
        %1934 = vmatpush2.bf16.msra.mxu0 %v1386
        %1935 = vmatprep.subr.bf16.mxu0 %v1385
        %1936 = vmatpush2.bf16.msra.mxu0 %v1384
        %1937 = vmatprep.subr.bf16.mxu0 %v1383
        %1938 = vmatpush2.bf16.msra.mxu0 %v1382
        %1939 = vmatprep.subr.bf16.mxu0 %v1381
        %1940 = vmatpush2.bf16.msra.mxu0 %v1380
        %1941 = vmatprep.subr.bf16.mxu0 %v1379
        %1942 = vmatpush2.bf16.msra.mxu0 %v1378
        %1943 = vmatprep.subr.bf16.mxu0 %v1377
        %1944 = vmatpush2.bf16.msra.mxu0 %v1376
        %1945 = vmatprep.mubr.bf16.mxu0 %v727
        %1946 = vmatmul.mubr.bf16.gmra.mxu0 %v726
        %v1947 = vpop.f32.mrf.mxu0
        %v1948 = vadd.f32 %v1817, %v1947
        %v1949 = vpop.f32.mrf.mxu0
        %v1950 = vadd.f32 %v1819, %v1949
        %v1951 = vpop.f32.mrf.mxu0
        %v1952 = vadd.f32 %v1821, %v1951
        %v1953 = vpop.f32.mrf.mxu0
        %v1954 = vadd.f32 %v1823, %v1953
        %1955 = vmatprep.mubr.bf16.mxu0 %v735
        %1956 = vmatmul.mubr.bf16.gmra.mxu0 %v734
        %v1957 = vpop.f32.mrf.mxu0
        %v1958 = vadd.f32 %v1827, %v1957
        %v1959 = vpop.f32.mrf.mxu0
        %v1960 = vadd.f32 %v1829, %v1959
        %v1961 = vpop.f32.mrf.mxu0
        %v1962 = vadd.f32 %v1831, %v1961
        %v1963 = vpop.f32.mrf.mxu0
        %v1964 = vadd.f32 %v1833, %v1963
        %1965 = vmatprep.mubr.bf16.mxu0 %v743
        %1966 = vmatmul.mubr.bf16.gmra.mxu0 %v742
        %v1967 = vpop.f32.mrf.mxu0
        %v1968 = vadd.f32 %v1837, %v1967
        %v1969 = vpop.f32.mrf.mxu0
        %v1970 = vadd.f32 %v1839, %v1969
        %v1971 = vpop.f32.mrf.mxu0
        %v1972 = vadd.f32 %v1841, %v1971
        %v1973 = vpop.f32.mrf.mxu0
        %v1974 = vadd.f32 %v1843, %v1973
        %1975 = vmatprep.mubr.bf16.mxu0 %v751
        %1976 = vmatmul.mubr.bf16.gmra.mxu0 %v750
        %v1977 = vpop.f32.mrf.mxu0
        %v1978 = vadd.f32 %v1847, %v1977
        %v1979 = vpop.f32.mrf.mxu0
        %v1980 = vadd.f32 %v1849, %v1979
        %v1981 = vpop.f32.mrf.mxu0
        %v1982 = vadd.f32 %v1851, %v1981
        %v1983 = vpop.f32.mrf.mxu0
        %v1984 = vadd.f32 %v1853, %v1983
        %1985 = vmatprep.mubr.bf16.mxu0 %v759
        %1986 = vmatmul.mubr.bf16.gmra.mxu0 %v758
        %v1987 = vpop.f32.mrf.mxu0
        %v1988 = vadd.f32 %v1857, %v1987
        %v1989 = vpop.f32.mrf.mxu0
        %v1990 = vadd.f32 %v1859, %v1989
        %v1991 = vpop.f32.mrf.mxu0
        %v1992 = vadd.f32 %v1861, %v1991
        %v1993 = vpop.f32.mrf.mxu0
        %v1994 = vadd.f32 %v1863, %v1993
        %1995 = vmatprep.mubr.bf16.mxu0 %v767
        %1996 = vmatmul.mubr.bf16.gmra.mxu0 %v766
        %v1997 = vpop.f32.mrf.mxu0
        %v1998 = vadd.f32 %v1867, %v1997
        %v1999 = vpop.f32.mrf.mxu0
        %v2000 = vadd.f32 %v1869, %v1999
        %v2001 = vpop.f32.mrf.mxu0
        %v2002 = vadd.f32 %v1871, %v2001
        %v2003 = vpop.f32.mrf.mxu0
        %v2004 = vadd.f32 %v1873, %v2003
        %2005 = vmatprep.mubr.bf16.mxu0 %v775
        %2006 = vmatmul.mubr.bf16.gmra.mxu0 %v774
        %v2007 = vpop.f32.mrf.mxu0
        %v2008 = vadd.f32 %v1877, %v2007
        %v2009 = vpop.f32.mrf.mxu0
        %v2010 = vadd.f32 %v1879, %v2009
        %v2011 = vpop.f32.mrf.mxu0
        %v2012 = vadd.f32 %v1881, %v2011
        %v2013 = vpop.f32.mrf.mxu0
        %v2014 = vadd.f32 %v1883, %v2013
        %2015 = vmatprep.mubr.bf16.mxu0 %v783
        %2016 = vmatmul.mubr.bf16.gmra.mxu0 %v782
        %v2017 = vpop.f32.mrf.mxu0
        %v2018 = vadd.f32 %v1887, %v2017
        %v2019 = vpop.f32.mrf.mxu0
        %v2020 = vadd.f32 %v1889, %v2019
        %v2021 = vpop.f32.mrf.mxu0
        %v2022 = vadd.f32 %v1891, %v2021
        %v2023 = vpop.f32.mrf.mxu0
        %v2024 = vadd.f32 %v1893, %v2023
        %2025 = vmatprep.mubr.bf16.mxu0 %v791
        %2026 = vmatmul.mubr.bf16.gmra.mxu0 %v790
        %v2027 = vpop.f32.mrf.mxu0
        %v2028 = vadd.f32 %v1897, %v2027
        %v2029 = vpop.f32.mrf.mxu0
        %v2030 = vadd.f32 %v1899, %v2029
        %v2031 = vpop.f32.mrf.mxu0
        %v2032 = vadd.f32 %v1901, %v2031
        %v2033 = vpop.f32.mrf.mxu0
        %v2034 = vadd.f32 %v1903, %v2033
        %2035 = vmatprep.mubr.bf16.mxu0 %v799
        %2036 = vmatmul.mubr.bf16.gmra.mxu0 %v798
        %v2037 = vpop.f32.mrf.mxu0
        %v2038 = vadd.f32 %v1907, %v2037
        %v2039 = vpop.f32.mrf.mxu0
        %v2040 = vadd.f32 %v1909, %v2039
        %v2041 = vpop.f32.mrf.mxu0
        %v2042 = vpop.f32.mrf.mxu0
        %2043 = vdwg.mxu0
        %v2044 = vtanh.pop %v1948
        %v2045 = vtanh.pop %v1950
        %v2046 = vtanh.pop %v1952
        %v2047 = vtanh.pop %v1954
        %v2048 = vtanh.pop %v1958
        %v2049 = vtanh.pop %v1960
        %v2050 = vtanh.pop %v1962
        %v2051 = vtanh.pop %v1964
        %v2052 = vtanh.pop %v1968
        %v2053 = vtanh.pop %v1970
        %v2054 = vtanh.pop %v1972
        %v2055 = vtanh.pop %v1974
        %v2056 = vtanh.pop %v1978
        %v2057 = vtanh.pop %v1980
        %v2058 = vtanh.pop %v1982
        %v2059 = vtanh.pop %v1984
        %v2060 = vtanh.pop %v1988
        %v2061 = vtanh.pop %v1990
        %v2062 = vtanh.pop %v1992
        %v2063 = vtanh.pop %v1994
        %v2064 = vtanh.pop %v1998
        %v2065 = vtanh.pop %v2000
        %v2066 = vtanh.pop %v2002
        %v2067 = vtanh.pop %v2004
        %v2068 = vtanh.pop %v2008
        %v2069 = vtanh.pop %v2010
        %v2070 = vtanh.pop %v2012
        %v2071 = vtanh.pop %v2014
        %v2072 = vtanh.pop %v2018
        %v2073 = vtanh.pop %v2020
        %v2074 = vtanh.pop %v2022
        %v2075 = vtanh.pop %v2024
        %v2076 = vtanh.pop %v2028
        %v2077 = vtanh.pop %v2030
        %v2078 = vtanh.pop %v2032
        %v2079 = vtanh.pop %v2034
        %v2080 = vtanh.pop %v2038
        %v2081 = vtanh.pop %v2040
        %v2082 = vpack.c.bf16 %v2046, %v2044
        %v2083 = vpack.c.bf16 %v2047, %v2045
        %v2084 = vpack.c.bf16 %v2050, %v2048
        %v2085 = vpack.c.bf16 %v2051, %v2049
        %v2086 = vpack.c.bf16 %v2054, %v2052
        %v2087 = vpack.c.bf16 %v2055, %v2053
        %v2088 = vpack.c.bf16 %v2058, %v2056
        %v2089 = vpack.c.bf16 %v2059, %v2057
        %v2090 = vpack.c.bf16 %v2062, %v2060
        %v2091 = vpack.c.bf16 %v2063, %v2061
        %v2092 = vpack.c.bf16 %v2066, %v2064
        %v2093 = vpack.c.bf16 %v2067, %v2065
        %v2094 = vpack.c.bf16 %v2070, %v2068
        %v2095 = vpack.c.bf16 %v2071, %v2069
        %v2096 = vpack.c.bf16 %v2074, %v2072
        %v2097 = vpack.c.bf16 %v2075, %v2073
        %v2098 = vpack.c.bf16 %v2078, %v2076
        %v2099 = vpack.c.bf16 %v2079, %v2077
        %v2100 = vpack.c.bf16 %v2080, %v2080
        %v2101 = vpack.c.bf16 %v2081, %v2081
        %v2102 = vld [vmem:[#allocation7] sm:$0xf]
        %v2103 = vld [vmem:[#allocation7 + $0x4] sm:$0xf]
        %v2104 = vld [vmem:[#allocation7 + $0x8] sm:$0xf]
        %v2105 = vld [vmem:[#allocation7 + $0xc] sm:$0xf]
        %v2106 = vld [vmem:[#allocation7 + $0x10] sm:$0xf]
        %v2107 = vld [vmem:[#allocation7 + $0x14] sm:$0xf]
        %v2108 = vld [vmem:[#allocation7 + $0x18] sm:$0xf]
        %v2109 = vld [vmem:[#allocation7 + $0x1c] sm:$0xf]
        %v2110 = vld [vmem:[#allocation7 + $0x20] sm:$0xf]
        %v2111 = vld [vmem:[#allocation7 + $0x24] sm:$0xf]
        %v2112 = vld [vmem:[#allocation7 + $0x28] sm:$0xf]
        %v2113 = vld [vmem:[#allocation7 + $0x2c] sm:$0xf]
        %v2114 = vld [vmem:[#allocation7 + $0x30] sm:$0xf]
        %v2115 = vld [vmem:[#allocation7 + $0x34] sm:$0xf]
        %v2116 = vld [vmem:[#allocation7 + $0x38] sm:$0xf]
        %v2117 = vld [vmem:[#allocation7 + $0x3c] sm:$0xf]
        %v2118 = vld [vmem:[#allocation7 + $0x40] sm:$0xf]
        %v2119 = vld [vmem:[#allocation7 + $0x44] sm:$0xf]
        %v2120 = vld [vmem:[#allocation7 + $0x48] sm:$0xf]
        %v2121 = vld [vmem:[#allocation7 + $0x4c] sm:$0xf]
        %v2122 = vld [vmem:[#allocation7 + $0x50] sm:$0xf]
        %v2123 = vld [vmem:[#allocation7 + $0x54] sm:$0xf]
        %v2124 = vld [vmem:[#allocation7 + $0x58] sm:$0xf]
        %v2125 = vld [vmem:[#allocation7 + $0x5c] sm:$0xf]
        %v2126 = vld [vmem:[#allocation7 + $0x60] sm:$0xf]
        %v2127 = vld [vmem:[#allocation7 + $0x64] sm:$0xf]
        %v2128 = vld [vmem:[#allocation7 + $0x68] sm:$0xf]
        %v2129 = vld [vmem:[#allocation7 + $0x6c] sm:$0xf]
        %v2130 = vld [vmem:[#allocation7 + $0x70] sm:$0xf]
        %v2131 = vld [vmem:[#allocation7 + $0x74] sm:$0xf]
        %v2132 = vld [vmem:[#allocation7 + $0x78] sm:$0xf]
        %v2133 = vld [vmem:[#allocation7 + $0x7c] sm:$0xf]
        %v2134 = vld [vmem:[%s4] sm:$0x1]
        %v2136 = vlaneseq
        %v2137 = vshrl.u32 %v2136, 7
        %v2138 = vsub.s32 0, %v2137
        %v2139 = vrot.slane %v2134, %v2138
        %v2173 = vunpack.c.l.b16 %v2102
        %v2174 = vunpack.c.l.b16 %v2103
        %v2175 = vunpack.c.l.b16 %v2104
        %v2176 = vunpack.c.l.b16 %v2105
        %v2177 = vunpack.c.l.b16 %v2106
        %v2178 = vunpack.c.l.b16 %v2107
        %v2179 = vunpack.c.l.b16 %v2108
        %v2180 = vunpack.c.l.b16 %v2109
        %v2181 = vunpack.c.l.b16 %v2110
        %v2182 = vunpack.c.l.b16 %v2111
        %v2183 = vunpack.c.l.b16 %v2112
        %v2184 = vunpack.c.l.b16 %v2113
        %v2185 = vunpack.c.l.b16 %v2114
        %v2186 = vunpack.c.l.b16 %v2115
        %v2187 = vunpack.c.l.b16 %v2116
        %v2188 = vunpack.c.l.b16 %v2117
        %v2189 = vunpack.c.l.b16 %v2118
        %v2190 = vunpack.c.l.b16 %v2119
        %v2191 = vunpack.c.l.b16 %v2120
        %v2192 = vunpack.c.l.b16 %v2121
        %v2193 = vunpack.c.l.b16 %v2122
        %v2194 = vunpack.c.l.b16 %v2123
        %v2195 = vunpack.c.l.b16 %v2124
        %v2196 = vunpack.c.l.b16 %v2125
        %v2197 = vunpack.c.l.b16 %v2126
        %v2198 = vunpack.c.l.b16 %v2127
        %v2199 = vunpack.c.l.b16 %v2128
        %v2200 = vunpack.c.l.b16 %v2129
        %v2201 = vunpack.c.l.b16 %v2130
        %v2202 = vunpack.c.l.b16 %v2131
        %v2203 = vunpack.c.l.b16 %v2132
        %v2204 = vunpack.c.l.b16 %v2133
        %v2205 = vpack.c.b16 %v2174, %v2173
        %v2206 = vpack.c.b16 %v2176, %v2175
        %v2207 = vpack.c.b16 %v2178, %v2177
        %v2208 = vpack.c.b16 %v2180, %v2179
        %v2209 = vpack.c.b16 %v2182, %v2181
        %v2210 = vpack.c.b16 %v2184, %v2183
        %v2211 = vpack.c.b16 %v2186, %v2185
        %v2212 = vpack.c.b16 %v2188, %v2187
        %v2213 = vpack.c.b16 %v2190, %v2189
        %v2214 = vpack.c.b16 %v2192, %v2191
        %v2215 = vpack.c.b16 %v2194, %v2193
        %v2216 = vpack.c.b16 %v2196, %v2195
        %v2217 = vpack.c.b16 %v2198, %v2197
        %v2218 = vpack.c.b16 %v2200, %v2199
        %v2219 = vpack.c.b16 %v2202, %v2201
        %v2220 = vpack.c.b16 %v2204, %v2203
        %2237 = vmatprep.subr.bf16.mxu0 0
        %2238 = vmatpush1.bf16.msra.mxu0 %v2212
        %2239 = vmatprep.subr.bf16.mxu0 0
        %2240 = vmatpush1.bf16.msra.mxu0 %v2211
        %2241 = vmatprep.subr.bf16.mxu0 0
        %2242 = vmatpush1.bf16.msra.mxu0 %v2210
        %2243 = vmatprep.subr.bf16.mxu0 0
        %2244 = vmatpush1.bf16.msra.mxu0 %v2209
        %2245 = vmatprep.subr.bf16.mxu0 0
        %2246 = vmatpush1.bf16.msra.mxu0 %v2208
        %2247 = vmatprep.subr.bf16.mxu0 0
        %2248 = vmatpush1.bf16.msra.mxu0 %v2207
        %2249 = vmatprep.subr.bf16.mxu0 0
        %2250 = vmatpush1.bf16.msra.mxu0 %v2206
        %2251 = vmatprep.subr.bf16.mxu0 0
        %2252 = vmatpush1.bf16.msra.mxu0 %v2205
        %2253 = vmatprep.subr.bf16.mxu0 0
        %2254 = vmatpush2.bf16.msra.mxu0 %v2220
        %2255 = vmatprep.subr.bf16.mxu0 0
        %2256 = vmatpush2.bf16.msra.mxu0 %v2219
        %2257 = vmatprep.subr.bf16.mxu0 0
        %2258 = vmatpush2.bf16.msra.mxu0 %v2218
        %2259 = vmatprep.subr.bf16.mxu0 0
        %2260 = vmatpush2.bf16.msra.mxu0 %v2217
        %2261 = vmatprep.subr.bf16.mxu0 0
        %2262 = vmatpush2.bf16.msra.mxu0 %v2216
        %2263 = vmatprep.subr.bf16.mxu0 0
        %2264 = vmatpush2.bf16.msra.mxu0 %v2215
        %2265 = vmatprep.subr.bf16.mxu0 0
        %2266 = vmatpush2.bf16.msra.mxu0 %v2214
        %2267 = vmatprep.subr.bf16.mxu0 0
        %2268 = vmatpush2.bf16.msra.mxu0 %v2213
        %2269 = vmatprep.mubr.bf16.mxu0 %v2083
        %2270 = vmatmul.mubr.bf16.gmra.mxu0 %v2082
        %v2271 = vpop.f32.mrf.mxu0
        %v2272 = vadd.f32 %v2139, %v2271
        %v2273 = vpop.f32.mrf.mxu0
        %v2274 = vpop.f32.mrf.mxu0
        %v2275 = vadd.f32 %v2139, %v2274
        %v2276 = vpop.f32.mrf.mxu0
        %2277 = vmatprep.mubr.bf16.mxu0 %v2085
        %2278 = vmatmul.mubr.bf16.gmra.mxu0 %v2084
        %v2279 = vpop.f32.mrf.mxu0
        %v2280 = vadd.f32 %v2139, %v2279
        %v2281 = vpop.f32.mrf.mxu0
        %v2282 = vpop.f32.mrf.mxu0
        %v2283 = vadd.f32 %v2139, %v2282
        %v2284 = vpop.f32.mrf.mxu0
        %2285 = vmatprep.mubr.bf16.mxu0 %v2087
        %2286 = vmatmul.mubr.bf16.gmra.mxu0 %v2086
        %v2287 = vpop.f32.mrf.mxu0
        %v2288 = vadd.f32 %v2139, %v2287
        %v2289 = vpop.f32.mrf.mxu0
        %v2290 = vpop.f32.mrf.mxu0
        %v2291 = vadd.f32 %v2139, %v2290
        %v2292 = vpop.f32.mrf.mxu0
        %2293 = vmatprep.mubr.bf16.mxu0 %v2089
        %2294 = vmatmul.mubr.bf16.gmra.mxu0 %v2088
        %v2295 = vpop.f32.mrf.mxu0
        %v2296 = vadd.f32 %v2139, %v2295
        %v2297 = vpop.f32.mrf.mxu0
        %v2298 = vpop.f32.mrf.mxu0
        %v2299 = vadd.f32 %v2139, %v2298
        %v2300 = vpop.f32.mrf.mxu0
        %2301 = vmatprep.mubr.bf16.mxu0 %v2091
        %2302 = vmatmul.mubr.bf16.gmra.mxu0 %v2090
        %v2303 = vpop.f32.mrf.mxu0
        %v2304 = vadd.f32 %v2139, %v2303
        %v2305 = vpop.f32.mrf.mxu0
        %v2306 = vpop.f32.mrf.mxu0
        %v2307 = vadd.f32 %v2139, %v2306
        %v2308 = vpop.f32.mrf.mxu0
        %2309 = vmatprep.mubr.bf16.mxu0 %v2093
        %2310 = vmatmul.mubr.bf16.gmra.mxu0 %v2092
        %v2311 = vpop.f32.mrf.mxu0
        %v2312 = vadd.f32 %v2139, %v2311
        %v2313 = vpop.f32.mrf.mxu0
        %v2314 = vpop.f32.mrf.mxu0
        %v2315 = vadd.f32 %v2139, %v2314
        %v2316 = vpop.f32.mrf.mxu0
        %2317 = vmatprep.mubr.bf16.mxu0 %v2095
        %2318 = vmatmul.mubr.bf16.gmra.mxu0 %v2094
        %v2319 = vpop.f32.mrf.mxu0
        %v2320 = vadd.f32 %v2139, %v2319
        %v2321 = vpop.f32.mrf.mxu0
        %v2322 = vpop.f32.mrf.mxu0
        %v2323 = vadd.f32 %v2139, %v2322
        %v2324 = vpop.f32.mrf.mxu0
        %2325 = vmatprep.mubr.bf16.mxu0 %v2097
        %2326 = vmatmul.mubr.bf16.gmra.mxu0 %v2096
        %v2327 = vpop.f32.mrf.mxu0
        %v2328 = vadd.f32 %v2139, %v2327
        %v2329 = vpop.f32.mrf.mxu0
        %v2330 = vpop.f32.mrf.mxu0
        %v2331 = vadd.f32 %v2139, %v2330
        %v2332 = vpop.f32.mrf.mxu0
        %2333 = vmatprep.mubr.bf16.mxu0 %v2099
        %2334 = vmatmul.mubr.bf16.gmra.mxu0 %v2098
        %v2335 = vpop.f32.mrf.mxu0
        %v2336 = vadd.f32 %v2139, %v2335
        %v2337 = vpop.f32.mrf.mxu0
        %v2338 = vpop.f32.mrf.mxu0
        %v2339 = vadd.f32 %v2139, %v2338
        %v2340 = vpop.f32.mrf.mxu0
        %2341 = vmatprep.mubr.bf16.mxu0 %v2101
        %2342 = vmatmul.mubr.bf16.gmra.mxu0 %v2100
        %v2343 = vpop.f32.mrf.mxu0
        %v2344 = vadd.f32 %v2139, %v2343
        %v2345 = vpop.f32.mrf.mxu0
        %v2346 = vpop.f32.mrf.mxu0
        %v2347 = vpop.f32.mrf.mxu0
        %2348 = vdwg.mxu0
        %2349 = vst [vmem:[%s272] sm:$0xff] %v2272
        %2350 = vst [vmem:[%s272 + $0x8] sm:$0xff] %v2275
        %2351 = vst [vmem:[%s272 + $0x10] sm:$0xff] %v2280
        %2352 = vst [vmem:[%s272 + $0x18] sm:$0xff] %v2283
        %2353 = vst [vmem:[%s272 + $0x20] sm:$0xff] %v2288
        %2354 = vst [vmem:[%s272 + $0x28] sm:$0xff] %v2291
        %2355 = vst [vmem:[%s272 + $0x30] sm:$0xff] %v2296
        %2356 = vst [vmem:[%s272 + $0x38] sm:$0xff] %v2299
        %2357 = vst [vmem:[%s272 + $0x40] sm:$0xff] %v2304
        %2358 = vst [vmem:[%s272 + $0x48] sm:$0xff] %v2307
        %2359 = vst [vmem:[%s272 + $0x50] sm:$0xff] %v2312
        %2360 = vst [vmem:[%s272 + $0x58] sm:$0xff] %v2315
        %2361 = vst [vmem:[%s272 + $0x60] sm:$0xff] %v2320
        %2362 = vst [vmem:[%s272 + $0x68] sm:$0xff] %v2323
        %2363 = vst [vmem:[%s272 + $0x70] sm:$0xff] %v2328
        %2364 = vst [vmem:[%s272 + $0x78] sm:$0xff] %v2331
        %2365 = vst [vmem:[%s272 + $0x80] sm:$0xff] %v2336
        %2366 = vst [vmem:[%s272 + $0x88] sm:$0xff] %v2339
        %2367 = vst [vmem:[%s272 + $0x90] sm:$0xff] %v2344
        %s2368 = sand.u32 %s141, 1
        %s2369 = scalar_lea.sflag [#allocation4], %s2368
        %s2370 = sand.u32 %s141, 1
        %s2371 = smul.addr %s2370, 152
        %s2372 = scalar_lea.vmem [#allocation8], %s2371
        // Predicated region
        $region53: #{tpu_custom_call.1} parent=39 // pred_check
          %p2373 = pneg %p151
        $region54: #{tpu_custom_call.1} parent=39 // pred_check_branch
          %2375 = sbr.rel (%p2373) target = $region56
        $region55: #{tpu_custom_call.1} parent=39 // pred_region
          %s2376 = smul.u32 19, %s23
          %s2378 = ssub.s32 2432, 2432
          %2379 = vsyncadd %s2369, %s2378
          %s2380 = smul.addr %s2376, 128
          %s2381 = scalar_lea.hbm %s5, %s2380
          %s2382 = sshll.u32 %s2372, 4
          %s2383 = int_to_ptr.vmem [resolvable:$true] %s2382
          %2388 = dma.vmem_to_hbm [thread:$0]  %s2383, 2432, %s2381, %s2369, 128, 128, 8
        $region56: #{tpu_custom_call.1} parent=39 // pred_fallthru
          _
      $region40: #{tpu_custom_call.1} parent=5 // pred_fallthru
        _
      %p2389 = scmp.le.s32.totalorder 2, %s18
      // Predicated region
      $region57: #{tpu_custom_call.1} parent=5 // pred_check
        %p2390 = pneg %p2389
      $region58: #{tpu_custom_call.1} parent=5 // pred_check_branch
        %2392 = sbr.rel (%p2390) target = $region60
      $region59: #{tpu_custom_call.1} parent=5 // pred_region
        %s2393 = ssub.s32 %s18, 2
        // Predicated region
        $region61: #{tpu_custom_call.1} parent=59 // pred_check
          %p2394 = pneg %p157
        $region62: #{tpu_custom_call.1} parent=59 // pred_check_branch
          %2396 = sbr.rel (%p2394) target = $region64
        $region63: #{tpu_custom_call.1} parent=59 // pred_region
          %s2397 = sand.u32 %s142, 1
          %s2398 = scalar_lea.sflag [#allocation4], %s2397
          %s2399 = sand.u32 %s142, 1
          %s2400 = smul.addr %s2399, 152
          %s2401 = scalar_lea.vmem [#allocation8], %s2400
          %2402 = dma.done %s2398, 2432
        $region64: #{tpu_custom_call.1} parent=59 // pred_fallthru
          _
      $region60: #{tpu_custom_call.1} parent=5 // pred_fallthru
        _
    $region6: #{tpu_custom_call.1} parent=1 // loop_footer
      %s22 = sadd.s32 1, %s18
    $region7: #{tpu_custom_call.1} parent=1 // loop_footer_branch
      %17 = sbr.rel target = $region3
    $region8: #{tpu_custom_call.1} parent=1 // loop_exit
      _
    %2403 = vsyncpa [#allocation3], 1
    %s2404 = scalar_lea.sflag [#allocation3], 1
    %2405 = vsyncpa %s2404, 1
    %2406 = vsyncpa [#allocation6], 1
    %2407 = vsyncpa [#allocation4], 1
    %s2408 = scalar_lea.sflag [#allocation4], 1
    %2409 = vsyncpa %s2408, 1

</llo_original>
